<compile_context>
chip_gen: v6e
topology: v6e:2x2x1
jax: 0.10.0
libtpu: 0.0.40
codegen_flags: <defaults>
</compile_context>

<pallas_src>
import functools

import jax
import jax.numpy as jnp
from jax.experimental import pallas as pl
from jax.experimental.pallas import tpu as pltpu


_LANE = 128
_TM_ALIGN = 32        # int8 mask native sublane tile -> row blocks multiple of 32
_TM_CAP = 512         # big enough to cut h_j re-reads, small enough for >=2 row
_TN_CAP = 1024        # blocks (v7x megacore) and a few-MiB VMEM working set


def _round_up(x, m):
    return ((x + m - 1) // m) * m


def _pow2_tile(n, align, cap):
    """Smallest power-of-two multiple of `align` that is >= n, clipped at cap."""
    t = align
    while t < n and t * 2 <= cap:
        t *= 2
    return min(t, cap)


def _choose_tiles(n):
    tm = _pow2_tile(n, _TM_ALIGN, _TM_CAP)
    tn = _pow2_tile(n, _LANE, _TN_CAP)
    return tm, tn          # both powers of two -> lcm(tm, tn) == max(tm, tn)


def _vmem_limit_bytes():
    # ~48 MiB on v7x (64 MiB VMEM), ~96 MiB on v5e/v6e (128 MiB VMEM).
    try:
        cap = int(pltpu.get_tpu_info().vmem_capacity_bytes)
    except Exception:
        cap = 64 * 1024 * 1024
    return max(32 * 1024 * 1024, min(cap * 3 // 4, 100 * 1024 * 1024))


def _bf16_exp_ok():
    # v6e / v7x have a bf16-capable EUP (~2x exp throughput); v5e and older do not.
    try:
        kind = jax.devices()[0].device_kind.lower()
    except Exception:
        return False
    return ("v6" in kind) or ("v7" in kind)


def _edge_tile(h_i, h_j, sq_i, sq_jt, m, neg_inv_sig2, exp_bf16):
    """GraphConv edge values exp(-||h_i - h_j||^2 / sigma^2) on one (tm, tn) tile.

    h_i: (tm, Fp) f32, h_j: (tn, Fp) f32, sq_i: (tm, 1) f32, sq_jt: (1, tn) f32,
    m: (tm, tn) int8 mask, neg_inv_sig2: f32 scalar (= -1/sigma^2, hoisted).
    """
    # MXU handles the rhs "transpose" via contracting dims; HIGHEST keeps the
    # cancellation-sensitive ||a||^2+||b||^2-2ab subtraction in true f32.
    gram = jax.lax.dot_general(
        h_i, h_j,
        dimension_numbers=(((1,), (1,)), ((), ())),
        precision=jax.lax.Precision.HIGHEST,
        preferred_element_type=jnp.float32)                      # (tm, tn)
    d2 = jnp.maximum(sq_i + sq_jt - 2.0 * gram, 0.0)             # (tm, tn)
    z = d2 * neg_inv_sig2
    if exp_bf16:
        e = jnp.exp(z.astype(jnp.bfloat16)).astype(jnp.float32)  # bf16 EUP (v6e/v7x)
    else:
        e = jnp.exp(z)
    return jnp.where(m != 0, e, 0.0)


# -----------------------------------------------------------------------------
# Pass 1: row degrees of A -> D^{-1/2}.  Output block (tm,1) is resident across
# the (compacted) column-block axis; only nonzero blocks are visited.
# -----------------------------------------------------------------------------
def _dinv_kernel(scale_ref, cb_ref, cnt_ref,
                 h_i_ref, h_j_ref, sqi_ref, sqjt_ref, m_ref,
                 dinv_ref, *, exp_bf16):
    i = pl.program_id(0)
    j = pl.program_id(1)

    @pl.when(j == 0)
    def _init():
        dinv_ref[...] = jnp.zeros_like(dinv_ref)

    @pl.when(j < cnt_ref[i])                       # skip padded (empty) slots
    def _accum():
        a = _edge_tile(h_i_ref[...], h_j_ref[...], sqi_ref[...], sqjt_ref[...],
                       m_ref[...], scale_ref[0], exp_bf16)
        dinv_ref[...] += jnp.sum(a, axis=1, keepdims=True)

    @pl.when(j == pl.num_programs(1) - 1)
    def _finalize():
        deg = dinv_ref[...]
        dinv_ref[...] = jnp.where(deg > 0.0, jax.lax.rsqrt(deg), 0.0)


# -----------------------------------------------------------------------------
# Pass 2: recompute the edge tile, sym-normalize and spmm-accumulate:
#   out[i] = dinv[i] * sum_j a[i,j] * (dinv[j] * h[j])
# -----------------------------------------------------------------------------
def _prop_kernel(scale_ref, cb_ref, cnt_ref,
                 h_i_ref, h_j_ref, sqi_ref, sqjt_ref, m_ref,
                 dinv_i_ref, dinv_j_ref, out_ref, *, exp_bf16):
    i = pl.program_id(0)
    j = pl.program_id(1)

    @pl.when(j == 0)
    def _init():
        out_ref[...] = jnp.zeros_like(out_ref)

    @pl.when(j < cnt_ref[i])                       # skip padded (empty) slots
    def _accum():
        a = _edge_tile(h_i_ref[...], h_j_ref[...], sqi_ref[...], sqjt_ref[...],
                       m_ref[...], scale_ref[0], exp_bf16)
        hj = h_j_ref[...] * dinv_j_ref[...]        # fold col-norm into h_j (tn,Fp)*(tn,1)
        # Deliberately default precision: single bf16 MXU pass, f32 accumulate.
        out_ref[...] += jnp.dot(a, hj, preferred_element_type=jnp.float32)

    @pl.when(j == pl.num_programs(1) - 1)
    def _finalize():
        out_ref[...] = dinv_i_ref[...] * out_ref[...]            # (tm,1)*(tm,Fp)


# -----------------------------------------------------------------------------
# Block-sparse structure of the (padded) mask: per row block, compacted list of
# nonzero column-block ids + count.  Computed once in XLA, reused every pass.
# -----------------------------------------------------------------------------
def _block_structure(mask_pad, tm, tn):
    n_pad = mask_pad.shape[0]
    nbr, nbc = n_pad // tm, n_pad // tn
    nnz = (mask_pad != 0).reshape(nbr, tm, nbc, tn).sum(axis=(1, 3))   # (nbr,nbc)
    has = nnz > 0
    cnt = has.sum(axis=1).astype(jnp.int32)                            # (nbr,)
    max_blocks = max(int(jnp.max(cnt)), 1)                             # static grid extent
    order = jnp.argsort(jnp.where(has, 0, 1), axis=1).astype(jnp.int32)  # nonzero-first
    col_ids = order[:, :max_blocks]
    # Padded slots repeat the last valid block id -> no extra DMA, compute gated.
    last = jnp.take_along_axis(order, jnp.maximum(cnt - 1, 0)[:, None], axis=1)
    jcol = jnp.arange(max_blocks, dtype=jnp.int32)[None, :]
    col_ids = jnp.where(jcol < cnt[:, None], col_ids, last).astype(jnp.int32)
    return col_ids, cnt, max_blocks


# -----------------------------------------------------------------------------
# One adaptive-GraphConv + sym_norm + spmm propagation step (padded shapes).
# -----------------------------------------------------------------------------
def adapt_prop(h, mask_pad, sigma, blocks, exp_bf16):
    """h: (Np, Fp) f32 (Np tile-multiple, Fp % 128 == 0); mask_pad: (Np, Np) int8."""
    col_ids, cnt, max_blocks, tm, tn = blocks
    n, fp = h.shape
    assert mask_pad.shape == (n, n) and n % tm == 0 and n % tn == 0 and fp % _LANE == 0
    grid = (n // tm, max_blocks)

    # Hoisted scalars / slivers (XLA side): -1/sigma^2 and the squared norms.
    neg_inv_sig2 = (-1.0 / (jnp.asarray(sigma, jnp.float32) ** 2)).reshape(1)
    sq = jnp.sum(h * h, axis=1, keepdims=True)      # (Np, 1)
    sq_t = sq.reshape(1, n)                         # (1, Np)

    params = pltpu.CompilerParams(
        dimension_semantics=("parallel", "arbitrary"),
        vmem_limit_bytes=_vmem_limit_bytes(),
    )

    # index_maps receive (i, j, scale_ref, col_ids_ref, cnt_ref) positionally.
    h_i_spec = pl.BlockSpec((tm, fp), lambda i, j, s, cb, c: (i, 0))
    h_j_spec = pl.BlockSpec((tn, fp), lambda i, j, s, cb, c: (cb[i, j], 0))
    sqi_spec = pl.BlockSpec((tm, 1), lambda i, j, s, cb, c: (i, 0))
    sqjt_spec = pl.BlockSpec((1, tn), lambda i, j, s, cb, c: (0, cb[i, j]))
    m_spec = pl.BlockSpec((tm, tn), lambda i, j, s, cb, c: (i, cb[i, j]))
    dinv_i_spec = pl.BlockSpec((tm, 1), lambda i, j, s, cb, c: (i, 0))
    dinv_j_spec = pl.BlockSpec((tn, 1), lambda i, j, s, cb, c: (cb[i, j], 0))

    dinv = pl.pallas_call(
        functools.partial(_dinv_kernel, exp_bf16=exp_bf16),
        out_shape=jax.ShapeDtypeStruct((n, 1), jnp.float32),
        grid_spec=pltpu.PrefetchScalarGridSpec(
            num_scalar_prefetch=3,
            grid=grid,
            in_specs=[h_i_spec, h_j_spec, sqi_spec, sqjt_spec, m_spec],
            out_specs=pl.BlockSpec((tm, 1), lambda i, j, s, cb, c: (i, 0)),
        ),
        compiler_params=params,
    )(neg_inv_sig2, col_ids, cnt, h, h, sq, sq_t, mask_pad)

    out = pl.pallas_call(
        functools.partial(_prop_kernel, exp_bf16=exp_bf16),
        out_shape=jax.ShapeDtypeStruct((n, fp), jnp.float32),
        grid_spec=pltpu.PrefetchScalarGridSpec(
            num_scalar_prefetch=3,
            grid=grid,
            in_specs=[h_i_spec, h_j_spec, sqi_spec, sqjt_spec, m_spec,
                      dinv_i_spec, dinv_j_spec],
            out_specs=pl.BlockSpec((tm, fp), lambda i, j, s, cb, c: (i, 0)),
        ),
        compiler_params=params,
    )(neg_inv_sig2, col_ids, cnt, h, h, sq, sq_t, mask_pad, dinv, dinv)
    return out


# -----------------------------------------------------------------------------
# GNN.forward glue (gen_feats(subgraph_data) @ W, use_adapt_gcs=True path)
# -----------------------------------------------------------------------------
def gnn_forward(X, Y_one_hot_train, adj_mask_i8, root_n_id, sigmas, W,
                x_iters, y_iters):
    n, x_dims = X.shape
    y_dims = Y_one_hot_train.shape[1]

    # Fixed, aligned tiles; pad N to a tile multiple with zero mask rows/cols
    # (zeros contribute nothing to degrees nor the spmm) -- no untiled fallback.
    tm, tn = _choose_tiles(n)
    n_pad = _round_up(n, max(tm, tn))
    pad_n = n_pad - n

    mask_pad = adj_mask_i8.astype(jnp.int8)
    if pad_n:
        mask_pad = jnp.pad(mask_pad, ((0, pad_n), (0, pad_n)))

    col_ids, cnt, max_blocks = _block_structure(mask_pad, tm, tn)
    blocks = (col_ids, cnt, max_blocks, tm, tn)
    exp_bf16 = _bf16_exp_ok()

    def pad_feats(a):
        f = a.shape[1]
        fp = _round_up(f, _LANE)
        return jnp.pad(a.astype(jnp.float32), ((0, pad_n), (0, fp - f)))

    # Feature propagation (lane-dense padded layout; padding is inert).
    outputs_x = [pad_feats(X)]
    for it in range(x_iters):
        outputs_x.append(adapt_prop(outputs_x[-1], mask_pad, sigmas[it],
                                    blocks, exp_bf16))

    # Label propagation: labels at root nodes masked to 0 first.
    Y = Y_one_hot_train.astype(jnp.float32).at[root_n_id].set(0.0)
    Yp = pad_feats(Y)
    outputs_y = []
    for it in range(y_iters):
        src = Yp if it == 0 else outputs_y[-1]
        outputs_y.append(adapt_prop(src, mask_pad, sigmas[x_iters + it],
                                    blocks, exp_bf16))

    feats = ([o[:n, :x_dims] for o in outputs_x] +
             [o[:n, :y_dims] for o in outputs_y])
    node_feats = jnp.concatenate(feats, axis=1)[root_n_id, :]

    # Final projection is a tiny (n_roots, K) @ (K, y_dims) matmul -- far below
    # the (8,128) TPU tile; a dedicated pallas_call is pure launch + masked-store
    # overhead, so XLA handles it.
    return node_feats @ W.astype(jnp.float32)


# -----------------------------------------------------------------------------
# Example
# -----------------------------------------------------------------------------
if __name__ == "__main__":
    # TODO(synk): torch_sparse SparseTensor COO output is represented here as a
    # dense int8 edge mask and fused into the sym_norm+spmm consumer instead of
    # being materialized as a sparse tensor.
    N = 32          # nodes in the subgraph
    x_dims = 16     # input feature dim
    y_dims = 8      # number of classes
    x_iters = 2
    y_iters = 2
    n_roots = 4

    key = jax.random.PRNGKey(0)
    kx, ky, kw = jax.random.split(key, 3)

    # Node features.
    X = jax.random.normal(kx, (N, x_dims), dtype=jnp.float32)

    # One-hot training labels.
    labels = jax.random.randint(ky, (N,), 0, y_dims)
    Y_one_hot_train = jax.nn.one_hot(labels, y_dims, dtype=jnp.float32)

    # Deterministic undirected graph: ring + self loops, as a dense int8 mask.
    idx = jnp.arange(N)
    adj_mask = jnp.zeros((N, N), jnp.int8)
    adj_mask = adj_mask.at[idx, (idx + 1) % N].set(1)
    adj_mask = adj_mask.at[(idx + 1) % N, idx].set(1)
    adj_mask = adj_mask.at[idx, idx].set(1)

    # Root node ids (the "batch" nodes whose features/preds are extracted).
    root_n_id = jnp.arange(n_roots, dtype=jnp.int32)

    # Parameters: one sigma per GraphConv (init 1.0, as in GraphConv.__init__);
    # W is small random instead of the reference's zeros so the path is exercised.
    sigmas = [1.0] * (x_iters + y_iters)
    W_rows = x_dims * (1 + x_iters) + y_dims * y_iters
    W = 0.01 * jax.random.normal(kw, (W_rows, y_dims), dtype=jnp.float32)

    out = gnn_forward(X, Y_one_hot_train, adj_mask, root_n_id, sigmas, W,
                      x_iters, y_iters)
    out = jax.block_until_ready(out)
    assert out.shape == (n_roots, y_dims)
    assert bool(jnp.all(jnp.isfinite(out)))
    print("KERNEL_OK")
</pallas_src>

<mosaic_0001>
module attributes {stable_mosaic.version = 11 : i64} {
  func.func @_dinv_kernel(%arg0: i32, %arg1: i32, %arg2: memref<1xf32, #tpu.memory_space<smem>>, %arg3: memref<4x1xi32, #tpu.memory_space<smem>>, %arg4: memref<4xi32, #tpu.memory_space<smem>>, %arg5: memref<32x128xf32, #tpu.memory_space<vmem>>, %arg6: memref<128x128xf32, #tpu.memory_space<vmem>>, %arg7: memref<32x1xf32, #tpu.memory_space<vmem>>, %arg8: memref<1x128xf32, #tpu.memory_space<vmem>>, %arg9: memref<32x128xi8, #tpu.memory_space<vmem>>, %arg10: memref<32x1xf32, #tpu.memory_space<vmem>>) attributes {dimension_semantics = [#tpu.dimension_semantics<parallel>, #tpu.dimension_semantics<arbitrary>], iteration_bounds = array<i64: 4, 1>, scalar_prefetch = 3 : i64, scratch_operands = 0 : i64, tpu.core_type = #tpu.core_type<tc>, window_params = [{transform_indices = @transform_0, window_bounds = array<i64: 32, 128>}, {transform_indices = @transform_1, window_bounds = array<i64: 128, 128>}, {transform_indices = @transform_2, window_bounds = array<i64: 32, 1>}, {transform_indices = @transform_3, window_bounds = array<i64: 1, 128>}, {transform_indices = @transform_4, window_bounds = array<i64: 32, 128>}, {transform_indices = @transform_5, window_bounds = array<i64: 32, 1>}]} {
    %c0_i32 = arith.constant 0 : i32
    %0 = arith.cmpi eq, %arg1, %c0_i32 : i32
    %1 = arith.extui %0 : i1 to i32
    %c0_i32_0 = arith.constant 0 : i32
    %2 = arith.cmpi ne, %1, %c0_i32_0 : i32
    scf.if %2 {
      %cst = arith.constant 0.000000e+00 : f32
      %11 = vector.broadcast %cst : f32 to vector<32x1xf32>
      %c0 = arith.constant 0 : index
      %c0_4 = arith.constant 0 : index
      %12 = vector.load %arg10[%c0, %c0_4] : memref<32x1xf32, #tpu.memory_space<vmem>>, vector<32x1xf32>
      tpu.vector_store %arg10[%c0, %c0_4], %11 {strides = array<i32>} : memref<32x1xf32, #tpu.memory_space<vmem>>, vector<32x1xf32>,
    } else {
    }
    %3 = arith.index_cast %arg0 : i32 to index
    %4 = memref.load %arg4[%3] : memref<4xi32, #tpu.memory_space<smem>>
    %5 = arith.cmpi slt, %arg1, %4 : i32
    %6 = arith.extui %5 : i1 to i32
    %c0_i32_1 = arith.constant 0 : i32
    %7 = arith.cmpi ne, %6, %c0_i32_1 : i32
    scf.if %7 {
      %c0 = arith.constant 0 : index
      %c0_4 = arith.constant 0 : index
      %11 = vector.load %arg5[%c0, %c0_4] : memref<32x128xf32, #tpu.memory_space<vmem>>, vector<32x128xf32>
      %c0_5 = arith.constant 0 : index
      %c0_6 = arith.constant 0 : index
      %12 = vector.load %arg6[%c0_5, %c0_6] : memref<128x128xf32, #tpu.memory_space<vmem>>, vector<128x128xf32>
      %c0_7 = arith.constant 0 : index
      %c0_8 = arith.constant 0 : index
      %13 = vector.load %arg7[%c0_7, %c0_8] : memref<32x1xf32, #tpu.memory_space<vmem>>, vector<32x1xf32>
      %c0_9 = arith.constant 0 : index
      %c0_10 = arith.constant 0 : index
      %14 = vector.load %arg8[%c0_9, %c0_10] : memref<1x128xf32, #tpu.memory_space<vmem>>, vector<1x128xf32>
      %c0_11 = arith.constant 0 : index
      %c0_12 = arith.constant 0 : index
      %15 = vector.load %arg9[%c0_11, %c0_12] : memref<32x128xi8, #tpu.memory_space<vmem>>, vector<32x128xi8>
      %c0_13 = arith.constant 0 : index
      %16 = memref.load %arg2[%c0_13] : memref<1xf32, #tpu.memory_space<smem>>
      %cst = arith.constant dense<0.000000e+00> : vector<32x128xf32>
      %17 = tpu.matmul %11, %12, %cst {dimension_numbers = #tpu.dot_dimension_numbers<[1], [1], [0], [0], [0, 0, 1, 0], [], []>, precision = #tpu.contract_precision<fp32>} : vector<32x128xf32>, vector<128x128xf32>, vector<32x128xf32> -> vector<32x128xf32>
      %18 = vector.broadcast %13 : vector<32x1xf32> to vector<32x128xf32>
      %19 = vector.broadcast %14 : vector<1x128xf32> to vector<32x128xf32>
      %20 = arith.addf %18, %19 : vector<32x128xf32>
      %cst_14 = arith.constant 2.000000e+00 : f32
      %21 = vector.broadcast %cst_14 : f32 to vector<32x128xf32>
      %22 = arith.mulf %21, %17 : vector<32x128xf32>
      %23 = arith.subf %20, %22 : vector<32x128xf32>
      %cst_15 = arith.constant 0.000000e+00 : f32
      %24 = vector.broadcast %cst_15 : f32 to vector<32x128xf32>
      %25 = arith.maximumf %23, %24 : vector<32x128xf32>
      %26 = vector.broadcast %16 : f32 to vector<32x128xf32>
      %27 = arith.mulf %25, %26 : vector<32x128xf32>
      %28 = math.exp %27 : vector<32x128xf32>
      %c0_i8 = arith.constant 0 : i8
      %29 = vector.broadcast %c0_i8 : i8 to vector<32x128xi8>
      %30 = arith.cmpi ne, %15, %29 : vector<32x128xi8>
      %cst_16 = arith.constant 0.000000e+00 : f32
      %31 = vector.broadcast %cst_16 : f32 to vector<32x128xf32>
      %32 = arith.select %30, %28, %31 : vector<32x128xi1>, vector<32x128xf32>
      %c0_17 = arith.constant 0 : index
      %c0_18 = arith.constant 0 : index
      %33 = vector.load %arg10[%c0_17, %c0_18] : memref<32x1xf32, #tpu.memory_space<vmem>>, vector<32x1xf32>
      %cst_19 = arith.constant dense<0.000000e+00> : vector<32xf32>
      %34 = vector.multi_reduction <add>, %32, %cst_19 [1] : vector<32x128xf32> to vector<32xf32>
      %35 = vector.shape_cast %34 : vector<32xf32> to vector<32x1xf32>
      %36 = arith.addf %33, %35 : vector<32x1xf32>
      %c0_20 = arith.constant 0 : index
      %c0_21 = arith.constant 0 : index
      %37 = vector.load %arg10[%c0_20, %c0_21] : memref<32x1xf32, #tpu.memory_space<vmem>>, vector<32x1xf32>
      tpu.vector_store %arg10[%c0_20, %c0_21], %36 {strides = array<i32>} : memref<32x1xf32, #tpu.memory_space<vmem>>, vector<32x1xf32>,
    } else {
    }
    %c0_i32_2 = arith.constant 0 : i32
    %8 = arith.cmpi eq, %arg1, %c0_i32_2 : i32
    %9 = arith.extui %8 : i1 to i32
    %c0_i32_3 = arith.constant 0 : i32
    %10 = arith.cmpi ne, %9, %c0_i32_3 : i32
    scf.if %10 {
      %c0 = arith.constant 0 : index
      %c0_4 = arith.constant 0 : index
      %11 = vector.load %arg10[%c0, %c0_4] : memref<32x1xf32, #tpu.memory_space<vmem>>, vector<32x1xf32>
      %cst = arith.constant 0.000000e+00 : f32
      %12 = vector.broadcast %cst : f32 to vector<32x1xf32>
      %13 = arith.cmpf ogt, %11, %12 : vector<32x1xf32>
      %14 = math.rsqrt %11 : vector<32x1xf32>
      %cst_5 = arith.constant 0.000000e+00 : f32
      %15 = vector.broadcast %cst_5 : f32 to vector<32x1xf32>
      %16 = arith.select %13, %14, %15 : vector<32x1xi1>, vector<32x1xf32>
      %c0_6 = arith.constant 0 : index
      %c0_7 = arith.constant 0 : index
      %17 = vector.load %arg10[%c0_6, %c0_7] : memref<32x1xf32, #tpu.memory_space<vmem>>, vector<32x1xf32>
      tpu.vector_store %arg10[%c0_6, %c0_7], %16 {strides = array<i32>} : memref<32x1xf32, #tpu.memory_space<vmem>>, vector<32x1xf32>,
    } else {
    }
    return
  }
  func.func @transform_0(%arg0: i32, %arg1: i32, %arg2: memref<1xf32, #tpu.memory_space<smem>>, %arg3: memref<4x1xi32, #tpu.memory_space<smem>>, %arg4: memref<4xi32, #tpu.memory_space<smem>>) -> (i32, i32) {
    %c0_i32 = arith.constant 0 : i32
    %c0_i32_0 = arith.constant 0 : i32
    return %arg0, %c0_i32 : i32, i32
  }
  func.func @transform_1(%arg0: i32, %arg1: i32, %arg2: memref<1xf32, #tpu.memory_space<smem>>, %arg3: memref<4x1xi32, #tpu.memory_space<smem>>, %arg4: memref<4xi32, #tpu.memory_space<smem>>) -> (i32, i32) {
    %0 = arith.index_cast %arg0 : i32 to index
    %1 = arith.index_cast %arg1 : i32 to index
    %2 = memref.load %arg3[%0, %1] : memref<4x1xi32, #tpu.memory_space<smem>>
    %c0_i32 = arith.constant 0 : i32
    %c0_i32_0 = arith.constant 0 : i32
    return %2, %c0_i32 : i32, i32
  }
  func.func @transform_2(%arg0: i32, %arg1: i32, %arg2: memref<1xf32, #tpu.memory_space<smem>>, %arg3: memref<4x1xi32, #tpu.memory_space<smem>>, %arg4: memref<4xi32, #tpu.memory_space<smem>>) -> (i32, i32) {
    %c0_i32 = arith.constant 0 : i32
    %c0_i32_0 = arith.constant 0 : i32
    return %arg0, %c0_i32 : i32, i32
  }
  func.func @transform_3(%arg0: i32, %arg1: i32, %arg2: memref<1xf32, #tpu.memory_space<smem>>, %arg3: memref<4x1xi32, #tpu.memory_space<smem>>, %arg4: memref<4xi32, #tpu.memory_space<smem>>) -> (i32, i32) {
    %0 = arith.index_cast %arg0 : i32 to index
    %1 = arith.index_cast %arg1 : i32 to index
    %2 = memref.load %arg3[%0, %1] : memref<4x1xi32, #tpu.memory_space<smem>>
    %c0_i32 = arith.constant 0 : i32
    %c0_i32_0 = arith.constant 0 : i32
    return %c0_i32, %2 : i32, i32
  }
  func.func @transform_4(%arg0: i32, %arg1: i32, %arg2: memref<1xf32, #tpu.memory_space<smem>>, %arg3: memref<4x1xi32, #tpu.memory_space<smem>>, %arg4: memref<4xi32, #tpu.memory_space<smem>>) -> (i32, i32) {
    %0 = arith.index_cast %arg0 : i32 to index
    %1 = arith.index_cast %arg1 : i32 to index
    %2 = memref.load %arg3[%0, %1] : memref<4x1xi32, #tpu.memory_space<smem>>
    %c0_i32 = arith.constant 0 : i32
    return %arg0, %2 : i32, i32
  }
  func.func @transform_5(%arg0: i32, %arg1: i32, %arg2: memref<1xf32, #tpu.memory_space<smem>>, %arg3: memref<4x1xi32, #tpu.memory_space<smem>>, %arg4: memref<4xi32, #tpu.memory_space<smem>>) -> (i32, i32) {
    %c0_i32 = arith.constant 0 : i32
    %c0_i32_0 = arith.constant 0 : i32
    return %arg0, %c0_i32 : i32, i32
  }
}

</mosaic_0001>

<llo_original>
// kernel: tpu_custom_call.1
$region0: #{tpu_custom_call.1}
  #allocation0 [shape = 'u32[]', space=smem, size = 0x4, offset = 0x4, fixed_abs, tag = 'smem constant byte address 0x4 - core index']
  #allocation1 [shape = 'u32[144,128]{1,0:T(1,128)}', space=vmem, size = 0x12000, scoped, tag = 'internal scratch']
  #allocation2 [shape = 's32[1]{0}', space=sflag, size = 0x4, scoped, tag = 'scoped memory for tpu_custom_call.1']
  #allocation3 [shape = 'f32[1]{0:T(128)S(6)}', space=smem, size = 0x200, scoped, tag = 'prefetched SMEM operand 0']
  #allocation4 [shape = 'u8[2048]{0}', space=smem, size = 0x800, scoped, tag = 'prefetched SMEM operand 1']
  #allocation5 [shape = 'u8[512]{0}', space=smem, size = 0x200, scoped, tag = 'prefetched SMEM operand 2']
  %s0 = inlined_call_operand.<no memory space> [shape: f32[1], index: 0, kind: input, shape index: {}]
  %s1 = inlined_call_operand.vmem [shape: s32[4,1], index: 1, kind: input, shape index: {}]
  %s2 = inlined_call_operand.vmem [shape: s32[4], index: 2, kind: input, shape index: {}]
  %s3 = inlined_call_operand.vmem [shape: f32[128,128], index: 3, kind: input, shape index: {}]
  %s4 = inlined_call_operand.hbm [shape: f32[128,128], index: 4, kind: input, shape index: {}]
  %s5 = inlined_call_operand.vmem [shape: f32[128,1], index: 5, kind: input, shape index: {}]
  %s6 = inlined_call_operand.vmem [shape: f32[1,128], index: 6, kind: input, shape index: {}]
  %s7 = inlined_call_operand.hbm [shape: s8[128,128], index: 7, kind: input, shape index: {}]
  %s8 = inlined_call_operand.vmem [shape: f32[128,1], index: 8, kind: output, shape index: {}]
  %s9 = sld [smem:[#allocation0]]
  $region73: #{tpu_custom_call.1} parent=0
    _
  %s11 = ssub.s32 1, %s9
  %s12 = scalar_select 0, %s11, %s9
  %13 = sst [smem:[#allocation3]] %s0
  %s14 = sshll.u32 %s1, 4
  %s15 = int_to_ptr.vmem [resolvable:$true] %s14
  %17 = dma.vmem_to_smem %s15, 64, [#allocation4], [#allocation2]
  %s18 = sshll.u32 %s2, 4
  %s19 = int_to_ptr.vmem [resolvable:$true] %s18
  %21 = dma.vmem_to_smem %s19, 16, [#allocation5], [#allocation2]
  %22 = dma.done [#allocation2], 80
  %23 = sfence
  $region1: #{tpu_custom_call.1} parent=0
    #allocation6 [shape = 'u8[131072]{0}', space=vmem, size = 0x20000, scoped, tag = 'input window, operand 4']
    #allocation7 [shape = 's32[2]{0}', space=sflag, size = 0x8, scoped, tag = 'scoped memory for tpu_custom_call.1']
    #allocation8 [shape = 'u8[8192]{0}', space=vmem, size = 0x2000, scoped, tag = 'input window, operand 7']
    #allocation9 [shape = 's32[2]{0}', space=sflag, size = 0x8, scoped, tag = 'scoped memory for tpu_custom_call.1']
    %24 = vsyncpa [#allocation7], 0
    %s25 = scalar_lea.sflag [#allocation7], 1
    %26 = vsyncpa %s25, 0
    %27 = vsyncpa [#allocation9], 0
    %s28 = scalar_lea.sflag [#allocation9], 1
    %29 = vsyncpa %s28, 0
    loop: start=0, step=1, limit=6
    $region2: #{tpu_custom_call.1} parent=1 // loop_pre_header
      _
    $region3: #{tpu_custom_call.1} parent=1 // loop_header
      %s31 = sphi 0, %s35
      %p32 = scmp.ge.s32.totalorder %s31, 6
      %s38 = sphi 0, %s50
      %s39 = sphi 0, %s46
      %s40 = sphi 0, %s38
      %s41 = sphi 0, %s39
      %s42 = sphi 0, %s40
      %s43 = sphi 0, %s41
      %s53 = sphi 0, %s55
      %s56 = sphi 0, %s53
      %s57 = sphi 0, %s56
      %s73 = sphi 0, %s57
      %s95 = sphi 0, %s97
      %s98 = sphi 0, %s95
      %s99 = sphi 0, %s98
      %s115 = sphi 0, %s99
      %s121 = sphi 0, %s123
      %s124 = sphi 0, %s121
      %s125 = sphi 0, %s124
      %s141 = sphi 0, %s125
      %s163 = sphi 0, %s165
      %s166 = sphi 0, %s163
      %s167 = sphi 0, %s166
      %s183 = sphi 0, %s167
      %s207 = sphi 0, %s209
      %s210 = sphi 0, %s207
      %s211 = sphi 0, %s210
      %s227 = sphi 0, %s211
      %s233 = sphi 0, %s235
      %s236 = sphi 0, %s233
      %s237 = sphi 0, %s236
      %s253 = sphi 0, %s237
    $region4: #{tpu_custom_call.1} parent=1 // loop_header_branch
      %34 = sbr.rel (%p32) target = $region8
    $region5: #{tpu_custom_call.1} parent=1 // loop_body
      %s36 = ssub.s32 %s31, 1
      %s37 = ssub.s32 %s31, 2
      %s44 = sadd.s32 1, %s39
      %p45 = scmp.ge.s32.totalorder %s44, 1
      %s46 = scalar_select %p45, 0, %s44
      %s47 = sadd.s32 1, %s38
      %s48 = scalar_select %p45, %s47, %s38
      %p49 = scmp.ge.s32.totalorder %s48, 4
      %s50 = scalar_select %p49, 0, %s48
      %s51 = ssub.s32 %s38, %s50
      %p52 = scmp.eq.s32.totalorder %s51, 0
      %s54 = sadd.s32 %s53, 1
      %s55 = scalar_select %p52, %s53, %s54
      %p58 = pneg %p52
      %p59 = scmp.eq.s32.totalorder %s31, 3
      %p60 = por %p58, %p59
      %p61 = scmp.ne.s32.totalorder %s53, %s56
      %p62 = scmp.eq.s32.totalorder %s31, 0
      %p63 = por %p61, %p62
      %p64 = scmp.ne.s32.totalorder %s53, %s56
      %p65 = scmp.eq.s32.totalorder %s36, 3
      %p66 = por %p64, %p65
      %p67 = scmp.ne.s32.totalorder %s56, %s57
      %p68 = scmp.eq.s32.totalorder %s36, 0
      %p69 = por %p67, %p68
      %p70 = scmp.ne.s32.totalorder %s56, %s57
      %p71 = scmp.eq.s32.totalorder %s37, 3
      %p72 = por %p70, %p71
      %p74 = scmp.ne.s32.totalorder %s57, %s73
      %p75 = scmp.eq.s32.totalorder %s37, 0
      %p76 = por %p74, %p75
      %s77 = sshra.s32 %s39, 7
      %s78 = sand.u32 %s39, 127
      %s79 = sadd.s32 %s77, %s38
      %s80 = smul.u32 %s79, 128
      %s81 = sshra.s32 %s39, 7
      %s82 = sand.u32 %s39, 127
      %s83 = sadd.s32 %s80, %s82
      %s84 = sld [smem:[#allocation4 + %s83]]
      %s85 = sshra.s32 %s46, 7
      %s86 = sand.u32 %s46, 127
      %s87 = sadd.s32 %s85, %s50
      %s88 = smul.u32 %s87, 128
      %s89 = sshra.s32 %s46, 7
      %s90 = sand.u32 %s46, 127
      %s91 = sadd.s32 %s88, %s90
      %s92 = sld [smem:[#allocation4 + %s91]]
      %s93 = ssub.s32 %s84, %s92
      %p94 = scmp.eq.s32.totalorder %s93, 0
      %s96 = sadd.s32 %s95, 1
      %s97 = scalar_select %p94, %s95, %s96
      %p100 = pneg %p94
      %p101 = scmp.eq.s32.totalorder %s31, 3
      %p102 = por %p100, %p101
      %p103 = scmp.ne.s32.totalorder %s95, %s98
      %p104 = scmp.eq.s32.totalorder %s31, 0
      %p105 = por %p103, %p104
      %p106 = scmp.ne.s32.totalorder %s95, %s98
      %p107 = scmp.eq.s32.totalorder %s36, 3
      %p108 = por %p106, %p107
      %p109 = scmp.ne.s32.totalorder %s98, %s99
      %p110 = scmp.eq.s32.totalorder %s36, 0
      %p111 = por %p109, %p110
      %p112 = scmp.ne.s32.totalorder %s98, %s99
      %p113 = scmp.eq.s32.totalorder %s37, 3
      %p114 = por %p112, %p113
      %p116 = scmp.ne.s32.totalorder %s99, %s115
      %p117 = scmp.eq.s32.totalorder %s37, 0
      %p118 = por %p116, %p117
      %s119 = ssub.s32 %s38, %s50
      %p120 = scmp.eq.s32.totalorder %s119, 0
      %s122 = sadd.s32 %s121, 1
      %s123 = scalar_select %p120, %s121, %s122
      %p126 = pneg %p120
      %p127 = scmp.eq.s32.totalorder %s31, 3
      %p128 = por %p126, %p127
      %p129 = scmp.ne.s32.totalorder %s121, %s124
      %p130 = scmp.eq.s32.totalorder %s31, 0
      %p131 = por %p129, %p130
      %p132 = scmp.ne.s32.totalorder %s121, %s124
      %p133 = scmp.eq.s32.totalorder %s36, 3
      %p134 = por %p132, %p133
      %p135 = scmp.ne.s32.totalorder %s124, %s125
      %p136 = scmp.eq.s32.totalorder %s36, 0
      %p137 = por %p135, %p136
      %p138 = scmp.ne.s32.totalorder %s124, %s125
      %p139 = scmp.eq.s32.totalorder %s37, 3
      %p140 = por %p138, %p139
      %p142 = scmp.ne.s32.totalorder %s125, %s141
      %p143 = scmp.eq.s32.totalorder %s37, 0
      %p144 = por %p142, %p143
      %s145 = sshra.s32 %s39, 7
      %s146 = sand.u32 %s39, 127
      %s147 = sadd.s32 %s145, %s38
      %s148 = smul.u32 %s147, 128
      %s149 = sshra.s32 %s39, 7
      %s150 = sand.u32 %s39, 127
      %s151 = sadd.s32 %s148, %s150
      %s152 = sld [smem:[#allocation4 + %s151]]
      %s153 = sshra.s32 %s46, 7
      %s154 = sand.u32 %s46, 127
      %s155 = sadd.s32 %s153, %s50
      %s156 = smul.u32 %s155, 128
      %s157 = sshra.s32 %s46, 7
      %s158 = sand.u32 %s46, 127
      %s159 = sadd.s32 %s156, %s158
      %s160 = sld [smem:[#allocation4 + %s159]]
      %s161 = ssub.s32 %s152, %s160
      %p162 = scmp.eq.s32.totalorder %s161, 0
      %s164 = sadd.s32 %s163, 1
      %s165 = scalar_select %p162, %s163, %s164
      %p168 = pneg %p162
      %p169 = scmp.eq.s32.totalorder %s31, 3
      %p170 = por %p168, %p169
      %p171 = scmp.ne.s32.totalorder %s163, %s166
      %p172 = scmp.eq.s32.totalorder %s31, 0
      %p173 = por %p171, %p172
      %p174 = scmp.ne.s32.totalorder %s163, %s166
      %p175 = scmp.eq.s32.totalorder %s36, 3
      %p176 = por %p174, %p175
      %p177 = scmp.ne.s32.totalorder %s166, %s167
      %p178 = scmp.eq.s32.totalorder %s36, 0
      %p179 = por %p177, %p178
      %p180 = scmp.ne.s32.totalorder %s166, %s167
      %p181 = scmp.eq.s32.totalorder %s37, 3
      %p182 = por %p180, %p181
      %p184 = scmp.ne.s32.totalorder %s167, %s183
      %p185 = scmp.eq.s32.totalorder %s37, 0
      %p186 = por %p184, %p185
      %s187 = sshra.s32 %s39, 7
      %s188 = sand.u32 %s39, 127
      %s189 = sadd.s32 %s187, %s38
      %s190 = smul.u32 %s189, 128
      %s191 = sshra.s32 %s39, 7
      %s192 = sand.u32 %s39, 127
      %s193 = sadd.s32 %s190, %s192
      %s194 = sld [smem:[#allocation4 + %s193]]
      %s195 = sshra.s32 %s46, 7
      %s196 = sand.u32 %s46, 127
      %s197 = sadd.s32 %s195, %s50
      %s198 = smul.u32 %s197, 128
      %s199 = sshra.s32 %s46, 7
      %s200 = sand.u32 %s46, 127
      %s201 = sadd.s32 %s198, %s200
      %s202 = sld [smem:[#allocation4 + %s201]]
      %s203 = ssub.s32 %s38, %s50
      %s204 = ssub.s32 %s194, %s202
      %s205 = sor.u32 %s203, %s204
      %p206 = scmp.eq.s32.totalorder %s205, 0
      %s208 = sadd.s32 %s207, 1
      %s209 = scalar_select %p206, %s207, %s208
      %p212 = pneg %p206
      %p213 = scmp.eq.s32.totalorder %s31, 3
      %p214 = por %p212, %p213
      %p215 = scmp.ne.s32.totalorder %s207, %s210
      %p216 = scmp.eq.s32.totalorder %s31, 0
      %p217 = por %p215, %p216
      %p218 = scmp.ne.s32.totalorder %s207, %s210
      %p219 = scmp.eq.s32.totalorder %s36, 3
      %p220 = por %p218, %p219
      %p221 = scmp.ne.s32.totalorder %s210, %s211
      %p222 = scmp.eq.s32.totalorder %s36, 0
      %p223 = por %p221, %p222
      %p224 = scmp.ne.s32.totalorder %s210, %s211
      %p225 = scmp.eq.s32.totalorder %s37, 3
      %p226 = por %p224, %p225
      %p228 = scmp.ne.s32.totalorder %s211, %s227
      %p229 = scmp.eq.s32.totalorder %s37, 0
      %p230 = por %p228, %p229
      %s231 = ssub.s32 %s38, %s50
      %p232 = scmp.eq.s32.totalorder %s231, 0
      %s234 = sadd.s32 %s233, 1
      %s235 = scalar_select %p232, %s233, %s234
      %p238 = pneg %p232
      %p239 = scmp.eq.s32.totalorder %s31, 3
      %p240 = por %p238, %p239
      %p241 = scmp.ne.s32.totalorder %s233, %s236
      %p242 = scmp.eq.s32.totalorder %s31, 0
      %p243 = por %p241, %p242
      %p244 = scmp.ne.s32.totalorder %s233, %s236
      %p245 = scmp.eq.s32.totalorder %s36, 3
      %p246 = por %p244, %p245
      %p247 = scmp.ne.s32.totalorder %s236, %s237
      %p248 = scmp.eq.s32.totalorder %s36, 0
      %p249 = por %p247, %p248
      %p250 = scmp.ne.s32.totalorder %s236, %s237
      %p251 = scmp.eq.s32.totalorder %s37, 3
      %p252 = por %p250, %p251
      %p254 = scmp.ne.s32.totalorder %s237, %s253
      %p255 = scmp.eq.s32.totalorder %s37, 0
      %p256 = por %p254, %p255
      %p257 = scmp.le.s32.totalorder 1, %s31
      %p258 = scmp.lt.s32.totalorder %s31, 5
      %p259 = pnand %p257, %p258
      %p260 = pneg %p259
      // Predicated region
      $region9: #{tpu_custom_call.1} parent=5 // pred_check
        _
      $region10: #{tpu_custom_call.1} parent=5 // pred_check_branch
        %262 = sbr.rel (%p259) target = $region12
      $region11: #{tpu_custom_call.1} parent=5 // pred_region
        %s263 = ssub.s32 %s31, 1
      $region12: #{tpu_custom_call.1} parent=5 // pred_fallthru
        _
      %p264 = scmp.lt.s32.totalorder %s31, 4
      // Predicated region
      $region13: #{tpu_custom_call.1} parent=5 // pred_check
        %p265 = pneg %p264
      $region14: #{tpu_custom_call.1} parent=5 // pred_check_branch
        %267 = sbr.rel (%p265) target = $region16
      $region15: #{tpu_custom_call.1} parent=5 // pred_region
        // Predicated region
        $region17: #{tpu_custom_call.1} parent=15 // pred_check
          %p268 = pneg %p63
        $region18: #{tpu_custom_call.1} parent=15 // pred_check_branch
          %270 = sbr.rel (%p268) target = $region20
        $region19: #{tpu_custom_call.1} parent=15 // pred_region
          %s271 = smul.u32 4, %s38
          %p272 = scmp.lt.s32.totalorder %s271, 15
          %s273 = scalar_select %p272, %s271, 15
          %s274 = smul.addr %s273, 8
          %s275 = scalar_lea.vmem %s3, %s274
          %s276 = smul.u32 4, %s38
        $region20: #{tpu_custom_call.1} parent=15 // pred_fallthru
          _
        // Predicated region
        $region21: #{tpu_custom_call.1} parent=15 // pred_check
          %p277 = pneg %p105
        $region22: #{tpu_custom_call.1} parent=15 // pred_check_branch
          %279 = sbr.rel (%p277) target = $region24
        $region23: #{tpu_custom_call.1} parent=15 // pred_region
          %s280 = sand.u32 %s95, 1
          %s281 = scalar_lea.sflag [#allocation7], %s280
          %s282 = sand.u32 %s95, 1
          %s283 = smul.addr %s282, 128
          %s284 = scalar_lea.vmem [#allocation6], %s283
          %s285 = sshra.s32 %s39, 7
          %s286 = sand.u32 %s39, 127
          %s287 = sadd.s32 %s285, %s38
          %s288 = smul.u32 %s287, 128
          %s289 = sshra.s32 %s39, 7
          %s290 = sand.u32 %s39, 127
          %s291 = sadd.s32 %s288, %s290
          %s292 = sld [smem:[#allocation4 + %s291]]
          %s293 = smul.u32 16, %s292
          %s295 = ssub.s32 2048, 2048
          %296 = vsyncadd %s281, %s295
          %s297 = smul.addr %s293, 128
          %s298 = scalar_lea.hbm %s4, %s297
          %s299 = sshll.u32 %s284, 4
          %s300 = int_to_ptr.vmem [resolvable:$true] %s299
          %305 = dma.hbm_to_vmem [thread:$0]  %s298, 2048, %s300, %s281, 128, 128, 8
        $region24: #{tpu_custom_call.1} parent=15 // pred_fallthru
          _
        // Predicated region
        $region25: #{tpu_custom_call.1} parent=15 // pred_check
          %p306 = pneg %p131
        $region26: #{tpu_custom_call.1} parent=15 // pred_check_branch
          %308 = sbr.rel (%p306) target = $region28
        $region27: #{tpu_custom_call.1} parent=15 // pred_region
          %s309 = smul.u32 4, %s38
          %p310 = scmp.lt.s32.totalorder %s309, 15
          %s311 = scalar_select %p310, %s309, 15
          %s312 = smul.addr %s311, 8
          %s313 = scalar_lea.vmem %s5, %s312
          %s314 = smul.u32 4, %s38
        $region28: #{tpu_custom_call.1} parent=15 // pred_fallthru
          _
        // Predicated region
        $region29: #{tpu_custom_call.1} parent=15 // pred_check
          %p315 = pneg %p173
        $region30: #{tpu_custom_call.1} parent=15 // pred_check_branch
          %317 = sbr.rel (%p315) target = $region32
        $region31: #{tpu_custom_call.1} parent=15 // pred_region
          %s318 = sshra.s32 %s39, 7
          %s319 = sand.u32 %s39, 127
          %s320 = sadd.s32 %s318, %s38
          %s321 = smul.u32 %s320, 128
          %s322 = sshra.s32 %s39, 7
          %s323 = sand.u32 %s39, 127
          %s324 = sadd.s32 %s321, %s323
          %s325 = sld [smem:[#allocation4 + %s324]]
          %p326 = scmp.lt.s32.totalorder %s325, 0
          %s327 = scalar_select %p326, %s325, 0
          %s328 = scalar_lea.vmem %s6, %s327
          %s329 = sshra.s32 %s39, 7
          %s330 = sand.u32 %s39, 127
          %s331 = sadd.s32 %s329, %s38
          %s332 = smul.u32 %s331, 128
          %s333 = sshra.s32 %s39, 7
          %s334 = sand.u32 %s39, 127
          %s335 = sadd.s32 %s332, %s334
          %s336 = sld [smem:[#allocation4 + %s335]]
        $region32: #{tpu_custom_call.1} parent=15 // pred_fallthru
          _
        // Predicated region
        $region33: #{tpu_custom_call.1} parent=15 // pred_check
          %p337 = pneg %p217
        $region34: #{tpu_custom_call.1} parent=15 // pred_check_branch
          %339 = sbr.rel (%p337) target = $region36
        $region35: #{tpu_custom_call.1} parent=15 // pred_region
          %s340 = sand.u32 %s207, 1
          %s341 = scalar_lea.sflag [#allocation9], %s340
          %s342 = sand.u32 %s207, 1
          %s343 = smul.addr %s342, 8
          %s344 = scalar_lea.vmem [#allocation8], %s343
          %s345 = sshra.s32 %s39, 7
          %s346 = sand.u32 %s39, 127
          %s347 = sadd.s32 %s345, %s38
          %s348 = smul.u32 %s347, 128
          %s349 = sshra.s32 %s39, 7
          %s350 = sand.u32 %s39, 127
          %s351 = sadd.s32 %s348, %s350
          %s352 = sld [smem:[#allocation4 + %s351]]
          %s354 = ssub.s32 128, 128
          %355 = vsyncadd %s341, %s354
          %s356 = sadd.s32 %s352, %s38
          %s357 = smul.addr %s356, 128
          %s358 = scalar_lea.hbm %s7, %s357
          %s360 = sshll.u32 %s344, 4
          %s361 = int_to_ptr.vmem [resolvable:$true] %s360
          %363 = dma.hbm_to_vmem [thread:$0]  %s358, 128, %s361, %s341
        $region36: #{tpu_custom_call.1} parent=15 // pred_fallthru
          _
      $region16: #{tpu_custom_call.1} parent=5 // pred_fallthru
        _
      %p364 = scmp.le.s32.totalorder 1, %s31
      %p365 = scmp.lt.s32.totalorder %s31, 5
      %p366 = pnand %p364, %p365
      %p367 = pneg %p366
      // Predicated region
      $region37: #{tpu_custom_call.1} parent=5 // pred_check
        _
      $region38: #{tpu_custom_call.1} parent=5 // pred_check_branch
        %369 = sbr.rel (%p366) target = $region40
      $region39: #{tpu_custom_call.1} parent=5 // pred_region
        %s370 = ssub.s32 %s31, 1
        %s371 = sand.u32 %s98, 1
        %s372 = scalar_lea.sflag [#allocation7], %s371
        %s373 = sand.u32 %s98, 1
        %s374 = smul.addr %s373, 128
        %s375 = scalar_lea.vmem [#allocation6], %s374
        // Predicated region
        $region41: #{tpu_custom_call.1} parent=39 // pred_check
          %p376 = pneg %p111
        $region42: #{tpu_custom_call.1} parent=39 // pred_check_branch
          %378 = sbr.rel (%p376) target = $region44
        $region43: #{tpu_custom_call.1} parent=39 // pred_region
          %379 = dma.done %s372, 2048
        $region44: #{tpu_custom_call.1} parent=39 // pred_fallthru
          _
        %s380 = sand.u32 %s210, 1
        %s381 = scalar_lea.sflag [#allocation9], %s380
        %s382 = sand.u32 %s210, 1
        %s383 = smul.addr %s382, 8
        %s384 = scalar_lea.vmem [#allocation8], %s383
        // Predicated region
        $region45: #{tpu_custom_call.1} parent=39 // pred_check
          %p385 = pneg %p223
        $region46: #{tpu_custom_call.1} parent=39 // pred_check_branch
          %387 = sbr.rel (%p385) target = $region48
        $region47: #{tpu_custom_call.1} parent=39 // pred_region
          %388 = dma.done %s381, 128
        $region48: #{tpu_custom_call.1} parent=39 // pred_fallthru
          _
        %s389 = smul.u32 4, %s40
        %p390 = scmp.lt.s32.totalorder %s389, 15
        %s391 = scalar_select %p390, %s389, 15
        %s392 = smul.addr %s391, 8
        %s393 = scalar_lea.vmem %s3, %s392
        %p394 = pneg %p69
        %p395 = pneg %p66
        %s396 = sand.u32 %s98, 1
        %s397 = scalar_lea.sflag [#allocation7], %s396
        %s398 = sand.u32 %s98, 1
        %s399 = smul.addr %s398, 128
        %s400 = scalar_lea.vmem [#allocation6], %s399
        %p401 = pneg %p111
        %p402 = pneg %p108
        %s403 = smul.u32 4, %s40
        %p404 = scmp.lt.s32.totalorder %s403, 15
        %s405 = scalar_select %p404, %s403, 15
        %s406 = smul.addr %s405, 8
        %s407 = scalar_lea.vmem %s5, %s406
        %p408 = pneg %p137
        %p409 = pneg %p134
        %s410 = sshra.s32 %s41, 7
        %s411 = sand.u32 %s41, 127
        %s412 = sadd.s32 %s410, %s40
        %s413 = smul.u32 %s412, 128
        %s414 = sshra.s32 %s41, 7
        %s415 = sand.u32 %s41, 127
        %s416 = sadd.s32 %s413, %s415
        %s417 = sld [smem:[#allocation4 + %s416]]
        %p418 = scmp.lt.s32.totalorder %s417, 0
        %s419 = scalar_select %p418, %s417, 0
        %s420 = scalar_lea.vmem %s6, %s419
        %p421 = pneg %p179
        %p422 = pneg %p176
        %s423 = sand.u32 %s210, 1
        %s424 = scalar_lea.sflag [#allocation9], %s423
        %s425 = sand.u32 %s210, 1
        %s426 = smul.addr %s425, 8
        %s427 = scalar_lea.vmem [#allocation8], %s426
        %p428 = pneg %p223
        %p429 = pneg %p220
        %p430 = pneg %p249
        %p431 = pneg %p246
        %s432 = smul.u32 4, %s40
        %p433 = scmp.lt.s32.totalorder %s432, 15
        %s434 = scalar_select %p433, %s432, 15
        %s435 = smul.addr %s434, 8
        %s436 = scalar_lea.vmem %s8, %s435
        %s437 = smul.u32 4, %s40
        %p438 = scmp.lt.s32.totalorder %s437, 15
        %s439 = scalar_select %p438, %s437, 15
        %s440 = smul.addr %s439, 8
        %s441 = scalar_lea.vmem %s3, %s440
        %s442 = smul.u32 4, %s40
        %s443 = sshra.s32 %s41, 7
        %s444 = sand.u32 %s41, 127
        %s445 = sadd.s32 %s443, %s40
        %s446 = smul.u32 %s445, 128
        %s447 = sshra.s32 %s41, 7
        %s448 = sand.u32 %s41, 127
        %s449 = sadd.s32 %s446, %s448
        %s450 = sld [smem:[#allocation4 + %s449]]
        %s451 = smul.u32 16, %s450
        %s452 = smul.u32 4, %s40
        %p453 = scmp.lt.s32.totalorder %s452, 15
        %s454 = scalar_select %p453, %s452, 15
        %s455 = smul.addr %s454, 8
        %s456 = scalar_lea.vmem %s5, %s455
        %s457 = smul.u32 4, %s40
        %s458 = sshra.s32 %s41, 7
        %s459 = sand.u32 %s41, 127
        %s460 = sadd.s32 %s458, %s40
        %s461 = smul.u32 %s460, 128
        %s462 = sshra.s32 %s41, 7
        %s463 = sand.u32 %s41, 127
        %s464 = sadd.s32 %s461, %s463
        %s465 = sld [smem:[#allocation4 + %s464]]
        %p466 = scmp.lt.s32.totalorder %s465, 0
        %s467 = scalar_select %p466, %s465, 0
        %s468 = scalar_lea.vmem %s6, %s467
        %s469 = sshra.s32 %s41, 7
        %s470 = sand.u32 %s41, 127
        %s471 = sadd.s32 %s469, %s40
        %s472 = smul.u32 %s471, 128
        %s473 = sshra.s32 %s41, 7
        %s474 = sand.u32 %s41, 127
        %s475 = sadd.s32 %s472, %s474
        %s476 = sld [smem:[#allocation4 + %s475]]
        %s477 = sshra.s32 %s41, 7
        %s478 = sand.u32 %s41, 127
        %s479 = sadd.s32 %s477, %s40
        %s480 = smul.u32 %s479, 128
        %s481 = sshra.s32 %s41, 7
        %s482 = sand.u32 %s41, 127
        %s483 = sadd.s32 %s480, %s482
        %s484 = sld [smem:[#allocation4 + %s483]]
        %s485 = smul.u32 4, %s40
        %p486 = scmp.lt.s32.totalorder %s485, 15
        %s487 = scalar_select %p486, %s485, 15
        %s488 = smul.addr %s487, 8
        %s489 = scalar_lea.vmem %s8, %s488
        %s490 = smul.u32 4, %s40
        %p493 = scmp.eq.s32.totalorder %s41, 0
        // Predicated region
        $region49: #{tpu_custom_call.1} parent=39 // pred_check
          %p494 = pneg %p493
        $region50: #{tpu_custom_call.1} parent=39 // pred_check_branch
          %496 = sbr.rel (%p494) target = $region52
        $region51: #{tpu_custom_call.1} parent=39 // pred_region
          %vm497 = vcmask 7168
          %498 = vst.msk [vmem:[%s489] sm:$0xff] %vm497, 0.0
          %499 = vst.msk [vmem:[%s489 + $0x8] sm:$0xff] %vm497, 0.0
          %500 = vst.msk [vmem:[%s489 + $0x10] sm:$0xff] %vm497, 0.0
          %501 = vst.msk [vmem:[%s489 + $0x18] sm:$0xff] %vm497, 0.0
        $region52: #{tpu_custom_call.1} parent=39 // pred_fallthru
          _
        %s502 = sld [smem:[#allocation5 + %s40]]
        %p503 = scmp.lt.s32.totalorder %s41, %s502
        // Predicated region
        $region53: #{tpu_custom_call.1} parent=39 // pred_check
          %p504 = pneg %p503
        $region54: #{tpu_custom_call.1} parent=39 // pred_check_branch
          %506 = sbr.rel (%p504) target = $region56
        $region55: #{tpu_custom_call.1} parent=39 // pred_region
          %v507 = vld [vmem:[%s441] sm:$0xff]
          %v508 = vld [vmem:[%s441 + $0x8] sm:$0xff]
          %v509 = vld [vmem:[%s441 + $0x10] sm:$0xff]
          %v510 = vld [vmem:[%s441 + $0x18] sm:$0xff]
          %v511 = vld [vmem:[%s375] sm:$0xff]
          %v512 = vld [vmem:[%s375 + $0x8] sm:$0xff]
          %v513 = vld [vmem:[%s375 + $0x10] sm:$0xff]
          %v514 = vld [vmem:[%s375 + $0x18] sm:$0xff]
          %v515 = vld [vmem:[%s375 + $0x20] sm:$0xff]
          %v516 = vld [vmem:[%s375 + $0x28] sm:$0xff]
          %v517 = vld [vmem:[%s375 + $0x30] sm:$0xff]
          %v518 = vld [vmem:[%s375 + $0x38] sm:$0xff]
          %v519 = vld [vmem:[%s375 + $0x40] sm:$0xff]
          %v520 = vld [vmem:[%s375 + $0x48] sm:$0xff]
          %v521 = vld [vmem:[%s375 + $0x50] sm:$0xff]
          %v522 = vld [vmem:[%s375 + $0x58] sm:$0xff]
          %v523 = vld [vmem:[%s375 + $0x60] sm:$0xff]
          %v524 = vld [vmem:[%s375 + $0x68] sm:$0xff]
          %v525 = vld [vmem:[%s375 + $0x70] sm:$0xff]
          %v526 = vld [vmem:[%s375 + $0x78] sm:$0xff]
          %v527 = vld [vmem:[%s456] sm:$0xff]
          %v528 = vld [vmem:[%s456 + $0x8] sm:$0xff]
          %v529 = vld [vmem:[%s456 + $0x10] sm:$0xff]
          %v530 = vld [vmem:[%s456 + $0x18] sm:$0xff]
          %v531 = vld [vmem:[%s468] sm:$0x1]
          %v532 = vld [vmem:[%s384] sm:$0xff]
          %s533 = sld [smem:[#allocation3]]
          %534 = vmatprep.subr.mxu0 0.0
          %v535 = vand.u32 %v526, 4294901760
          %536 = vmatpush1.xpose.msra.mxu0 %v535
          %537 = vmatprep.subr.mxu0 0.0
          %v538 = vand.u32 %v525, 4294901760
          %539 = vmatpush1.xpose.msra.mxu0 %v538
          %540 = vmatprep.subr.mxu0 0.0
          %v541 = vand.u32 %v524, 4294901760
          %542 = vmatpush1.xpose.msra.mxu0 %v541
          %543 = vmatprep.subr.mxu0 0.0
          %v544 = vand.u32 %v523, 4294901760
          %545 = vmatpush1.xpose.msra.mxu0 %v544
          %546 = vmatprep.subr.mxu0 0.0
          %v547 = vand.u32 %v522, 4294901760
          %548 = vmatpush1.xpose.msra.mxu0 %v547
          %549 = vmatprep.subr.mxu0 0.0
          %v550 = vand.u32 %v521, 4294901760
          %551 = vmatpush1.xpose.msra.mxu0 %v550
          %552 = vmatprep.subr.mxu0 0.0
          %v553 = vand.u32 %v520, 4294901760
          %554 = vmatpush1.xpose.msra.mxu0 %v553
          %555 = vmatprep.subr.mxu0 0.0
          %v556 = vand.u32 %v519, 4294901760
          %557 = vmatpush1.xpose.msra.mxu0 %v556
          %558 = vmatprep.subr.mxu0 0.0
          %v559 = vand.u32 %v518, 4294901760
          %560 = vmatpush1.xpose.msra.mxu0 %v559
          %561 = vmatprep.subr.mxu0 0.0
          %v562 = vand.u32 %v517, 4294901760
          %563 = vmatpush1.xpose.msra.mxu0 %v562
          %564 = vmatprep.subr.mxu0 0.0
          %v565 = vand.u32 %v516, 4294901760
          %566 = vmatpush1.xpose.msra.mxu0 %v565
          %567 = vmatprep.subr.mxu0 0.0
          %v568 = vand.u32 %v515, 4294901760
          %569 = vmatpush1.xpose.msra.mxu0 %v568
          %570 = vmatprep.subr.mxu0 0.0
          %v571 = vand.u32 %v514, 4294901760
          %572 = vmatpush1.xpose.msra.mxu0 %v571
          %573 = vmatprep.subr.mxu0 0.0
          %v574 = vand.u32 %v513, 4294901760
          %575 = vmatpush1.xpose.msra.mxu0 %v574
          %576 = vmatprep.subr.mxu0 0.0
          %v577 = vand.u32 %v512, 4294901760
          %578 = vmatpush1.xpose.msra.mxu0 %v577
          %579 = vmatprep.subr.mxu0 0.0
          %v580 = vand.u32 %v511, 4294901760
          %581 = vmatpush1.xpose.msra.mxu0 %v580
          %582 = vmatprep.subr.mxu0 0.0
          %583 = vmatpush2.xpose.msra.mxu0 0.0
          %584 = vmatprep.subr.mxu0 0.0
          %585 = vmatpush2.xpose.msra.mxu0 0.0
          %586 = vmatprep.subr.mxu0 0.0
          %587 = vmatpush2.xpose.msra.mxu0 0.0
          %588 = vmatprep.subr.mxu0 0.0
          %589 = vmatpush2.xpose.msra.mxu0 0.0
          %590 = vmatprep.subr.mxu0 0.0
          %591 = vmatpush2.xpose.msra.mxu0 0.0
          %592 = vmatprep.subr.mxu0 0.0
          %593 = vmatpush2.xpose.msra.mxu0 0.0
          %594 = vmatprep.subr.mxu0 0.0
          %595 = vmatpush2.xpose.msra.mxu0 0.0
          %596 = vmatprep.subr.mxu0 0.0
          %597 = vmatpush2.xpose.msra.mxu0 0.0
          %598 = vmatprep.subr.mxu0 0.0
          %599 = vmatpush2.xpose.msra.mxu0 0.0
          %600 = vmatprep.subr.mxu0 0.0
          %601 = vmatpush2.xpose.msra.mxu0 0.0
          %602 = vmatprep.subr.mxu0 0.0
          %603 = vmatpush2.xpose.msra.mxu0 0.0
          %604 = vmatprep.subr.mxu0 0.0
          %605 = vmatpush2.xpose.msra.mxu0 0.0
          %606 = vmatprep.subr.mxu0 0.0
          %607 = vmatpush2.xpose.msra.mxu0 0.0
          %608 = vmatprep.subr.mxu0 0.0
          %609 = vmatpush2.xpose.msra.mxu0 0.0
          %610 = vmatprep.subr.mxu0 0.0
          %611 = vmatpush2.xpose.msra.mxu0 0.0
          %612 = vmatprep.subr.mxu0 0.0
          %613 = vmatpush2.xpose.msra.mxu0 0.0
          %614 = vmatprep.mubr.f32.mxu0 0.0
          %v615 = vand.u32 %v507, 4294901760
          %v616 = vsub.f32 %v507, %v615
          %v617 = vand.u32 %v616, 4294901760
          %v618 = vsub.f32 %v616, %v617
          %v619 = vand.u32 %v618, 4294901760
          %620 = vmatmul.mubr.f32.gmra.mxu0 %v619
          %v621 = vpop.f32.mrf.mxu0
          %v622 = vadd.f32 0.0, %v621
          %v623 = vpop.f32.mrf.mxu0
          %624 = vmatprep.mubr.f32.mxu0 0.0
          %v625 = vand.u32 %v508, 4294901760
          %v626 = vsub.f32 %v508, %v625
          %v627 = vand.u32 %v626, 4294901760
          %v628 = vsub.f32 %v626, %v627
          %v629 = vand.u32 %v628, 4294901760
          %630 = vmatmul.mubr.f32.gmra.mxu0 %v629
          %v631 = vpop.f32.mrf.mxu0
          %v632 = vadd.f32 0.0, %v631
          %v633 = vpop.f32.mrf.mxu0
          %634 = vmatprep.mubr.f32.mxu0 0.0
          %v635 = vand.u32 %v509, 4294901760
          %v636 = vsub.f32 %v509, %v635
          %v637 = vand.u32 %v636, 4294901760
          %v638 = vsub.f32 %v636, %v637
          %v639 = vand.u32 %v638, 4294901760
          %640 = vmatmul.mubr.f32.gmra.mxu0 %v639
          %v641 = vpop.f32.mrf.mxu0
          %v642 = vadd.f32 0.0, %v641
          %v643 = vpop.f32.mrf.mxu0
          %644 = vmatprep.mubr.f32.mxu0 0.0
          %v645 = vand.u32 %v510, 4294901760
          %v646 = vsub.f32 %v510, %v645
          %v647 = vand.u32 %v646, 4294901760
          %v648 = vsub.f32 %v646, %v647
          %v649 = vand.u32 %v648, 4294901760
          %650 = vmatmul.mubr.f32.gmra.mxu0 %v649
          %v651 = vpop.f32.mrf.mxu0
          %v652 = vadd.f32 0.0, %v651
          %v653 = vpop.f32.mrf.mxu0
          %654 = vdwg.mxu0
          %655 = vmatprep.subr.mxu0 0.0
          %v656 = vand.u32 %v526, 4294901760
          %v657 = vsub.f32 %v526, %v656
          %v658 = vand.u32 %v657, 4294901760
          %v659 = vsub.f32 %v657, %v658
          %v660 = vand.u32 %v659, 4294901760
          %661 = vmatpush1.xpose.msra.mxu0 %v660
          %662 = vmatprep.subr.mxu0 0.0
          %v663 = vand.u32 %v525, 4294901760
          %v664 = vsub.f32 %v525, %v663
          %v665 = vand.u32 %v664, 4294901760
          %v666 = vsub.f32 %v664, %v665
          %v667 = vand.u32 %v666, 4294901760
          %668 = vmatpush1.xpose.msra.mxu0 %v667
          %669 = vmatprep.subr.mxu0 0.0
          %v670 = vand.u32 %v524, 4294901760
          %v671 = vsub.f32 %v524, %v670
          %v672 = vand.u32 %v671, 4294901760
          %v673 = vsub.f32 %v671, %v672
          %v674 = vand.u32 %v673, 4294901760
          %675 = vmatpush1.xpose.msra.mxu0 %v674
          %676 = vmatprep.subr.mxu0 0.0
          %v677 = vand.u32 %v523, 4294901760
          %v678 = vsub.f32 %v523, %v677
          %v679 = vand.u32 %v678, 4294901760
          %v680 = vsub.f32 %v678, %v679
          %v681 = vand.u32 %v680, 4294901760
          %682 = vmatpush1.xpose.msra.mxu0 %v681
          %683 = vmatprep.subr.mxu0 0.0
          %v684 = vand.u32 %v522, 4294901760
          %v685 = vsub.f32 %v522, %v684
          %v686 = vand.u32 %v685, 4294901760
          %v687 = vsub.f32 %v685, %v686
          %v688 = vand.u32 %v687, 4294901760
          %689 = vmatpush1.xpose.msra.mxu0 %v688
          %690 = vmatprep.subr.mxu0 0.0
          %v691 = vand.u32 %v521, 4294901760
          %v692 = vsub.f32 %v521, %v691
          %v693 = vand.u32 %v692, 4294901760
          %v694 = vsub.f32 %v692, %v693
          %v695 = vand.u32 %v694, 4294901760
          %696 = vmatpush1.xpose.msra.mxu0 %v695
          %697 = vmatprep.subr.mxu0 0.0
          %v698 = vand.u32 %v520, 4294901760
          %v699 = vsub.f32 %v520, %v698
          %v700 = vand.u32 %v699, 4294901760
          %v701 = vsub.f32 %v699, %v700
          %v702 = vand.u32 %v701, 4294901760
          %703 = vmatpush1.xpose.msra.mxu0 %v702
          %704 = vmatprep.subr.mxu0 0.0
          %v705 = vand.u32 %v519, 4294901760
          %v706 = vsub.f32 %v519, %v705
          %v707 = vand.u32 %v706, 4294901760
          %v708 = vsub.f32 %v706, %v707
          %v709 = vand.u32 %v708, 4294901760
          %710 = vmatpush1.xpose.msra.mxu0 %v709
          %711 = vmatprep.subr.mxu0 0.0
          %v712 = vand.u32 %v518, 4294901760
          %v713 = vsub.f32 %v518, %v712
          %v714 = vand.u32 %v713, 4294901760
          %v715 = vsub.f32 %v713, %v714
          %v716 = vand.u32 %v715, 4294901760
          %717 = vmatpush1.xpose.msra.mxu0 %v716
          %718 = vmatprep.subr.mxu0 0.0
          %v719 = vand.u32 %v517, 4294901760
          %v720 = vsub.f32 %v517, %v719
          %v721 = vand.u32 %v720, 4294901760
          %v722 = vsub.f32 %v720, %v721
          %v723 = vand.u32 %v722, 4294901760
          %724 = vmatpush1.xpose.msra.mxu0 %v723
          %725 = vmatprep.subr.mxu0 0.0
          %v726 = vand.u32 %v516, 4294901760
          %v727 = vsub.f32 %v516, %v726
          %v728 = vand.u32 %v727, 4294901760
          %v729 = vsub.f32 %v727, %v728
          %v730 = vand.u32 %v729, 4294901760
          %731 = vmatpush1.xpose.msra.mxu0 %v730
          %732 = vmatprep.subr.mxu0 0.0
          %v733 = vand.u32 %v515, 4294901760
          %v734 = vsub.f32 %v515, %v733
          %v735 = vand.u32 %v734, 4294901760
          %v736 = vsub.f32 %v734, %v735
          %v737 = vand.u32 %v736, 4294901760
          %738 = vmatpush1.xpose.msra.mxu0 %v737
          %739 = vmatprep.subr.mxu0 0.0
          %v740 = vand.u32 %v514, 4294901760
          %v741 = vsub.f32 %v514, %v740
          %v742 = vand.u32 %v741, 4294901760
          %v743 = vsub.f32 %v741, %v742
          %v744 = vand.u32 %v743, 4294901760
          %745 = vmatpush1.xpose.msra.mxu0 %v744
          %746 = vmatprep.subr.mxu0 0.0
          %v747 = vand.u32 %v513, 4294901760
          %v748 = vsub.f32 %v513, %v747
          %v749 = vand.u32 %v748, 4294901760
          %v750 = vsub.f32 %v748, %v749
          %v751 = vand.u32 %v750, 4294901760
          %752 = vmatpush1.xpose.msra.mxu0 %v751
          %753 = vmatprep.subr.mxu0 0.0
          %v754 = vand.u32 %v512, 4294901760
          %v755 = vsub.f32 %v512, %v754
          %v756 = vand.u32 %v755, 4294901760
          %v757 = vsub.f32 %v755, %v756
          %v758 = vand.u32 %v757, 4294901760
          %759 = vmatpush1.xpose.msra.mxu0 %v758
          %760 = vmatprep.subr.mxu0 0.0
          %v761 = vand.u32 %v511, 4294901760
          %v762 = vsub.f32 %v511, %v761
          %v763 = vand.u32 %v762, 4294901760
          %v764 = vsub.f32 %v762, %v763
          %v765 = vand.u32 %v764, 4294901760
          %766 = vmatpush1.xpose.msra.mxu0 %v765
          %767 = vmatprep.subr.mxu0 0.0
          %768 = vmatpush2.xpose.msra.mxu0 0.0
          %769 = vmatprep.subr.mxu0 0.0
          %770 = vmatpush2.xpose.msra.mxu0 0.0
          %771 = vmatprep.subr.mxu0 0.0
          %772 = vmatpush2.xpose.msra.mxu0 0.0
          %773 = vmatprep.subr.mxu0 0.0
          %774 = vmatpush2.xpose.msra.mxu0 0.0
          %775 = vmatprep.subr.mxu0 0.0
          %776 = vmatpush2.xpose.msra.mxu0 0.0
          %777 = vmatprep.subr.mxu0 0.0
          %778 = vmatpush2.xpose.msra.mxu0 0.0
          %779 = vmatprep.subr.mxu0 0.0
          %780 = vmatpush2.xpose.msra.mxu0 0.0
          %781 = vmatprep.subr.mxu0 0.0
          %782 = vmatpush2.xpose.msra.mxu0 0.0
          %783 = vmatprep.subr.mxu0 0.0
          %784 = vmatpush2.xpose.msra.mxu0 0.0
          %785 = vmatprep.subr.mxu0 0.0
          %786 = vmatpush2.xpose.msra.mxu0 0.0
          %787 = vmatprep.subr.mxu0 0.0
          %788 = vmatpush2.xpose.msra.mxu0 0.0
          %789 = vmatprep.subr.mxu0 0.0
          %790 = vmatpush2.xpose.msra.mxu0 0.0
          %791 = vmatprep.subr.mxu0 0.0
          %792 = vmatpush2.xpose.msra.mxu0 0.0
          %793 = vmatprep.subr.mxu0 0.0
          %794 = vmatpush2.xpose.msra.mxu0 0.0
          %795 = vmatprep.subr.mxu0 0.0
          %796 = vmatpush2.xpose.msra.mxu0 0.0
          %797 = vmatprep.subr.mxu0 0.0
          %798 = vmatpush2.xpose.msra.mxu0 0.0
          %799 = vmatprep.mubr.f32.mxu0 0.0
          %v800 = vand.u32 %v507, 4294901760
          %801 = vmatmul.mubr.f32.gmra.mxu0 %v800
          %v802 = vpop.f32.mrf.mxu0
          %v803 = vadd.f32 %v622, %v802
          %v804 = vpop.f32.mrf.mxu0
          %805 = vmatprep.mubr.f32.mxu0 0.0
          %v806 = vand.u32 %v508, 4294901760
          %807 = vmatmul.mubr.f32.gmra.mxu0 %v806
          %v808 = vpop.f32.mrf.mxu0
          %v809 = vadd.f32 %v632, %v808
          %v810 = vpop.f32.mrf.mxu0
          %811 = vmatprep.mubr.f32.mxu0 0.0
          %v812 = vand.u32 %v509, 4294901760
          %813 = vmatmul.mubr.f32.gmra.mxu0 %v812
          %v814 = vpop.f32.mrf.mxu0
          %v815 = vadd.f32 %v642, %v814
          %v816 = vpop.f32.mrf.mxu0
          %817 = vmatprep.mubr.f32.mxu0 0.0
          %v818 = vand.u32 %v510, 4294901760
          %819 = vmatmul.mubr.f32.gmra.mxu0 %v818
          %v820 = vpop.f32.mrf.mxu0
          %v821 = vadd.f32 %v652, %v820
          %v822 = vpop.f32.mrf.mxu0
          %823 = vdwg.mxu0
          %824 = vmatprep.subr.mxu0 0.0
          %v825 = vand.u32 %v526, 4294901760
          %v826 = vsub.f32 %v526, %v825
          %827 = vmatpush1.xpose.msra.mxu0 %v826
          %828 = vmatprep.subr.mxu0 0.0
          %v829 = vand.u32 %v525, 4294901760
          %v830 = vsub.f32 %v525, %v829
          %831 = vmatpush1.xpose.msra.mxu0 %v830
          %832 = vmatprep.subr.mxu0 0.0
          %v833 = vand.u32 %v524, 4294901760
          %v834 = vsub.f32 %v524, %v833
          %835 = vmatpush1.xpose.msra.mxu0 %v834
          %836 = vmatprep.subr.mxu0 0.0
          %v837 = vand.u32 %v523, 4294901760
          %v838 = vsub.f32 %v523, %v837
          %839 = vmatpush1.xpose.msra.mxu0 %v838
          %840 = vmatprep.subr.mxu0 0.0
          %v841 = vand.u32 %v522, 4294901760
          %v842 = vsub.f32 %v522, %v841
          %843 = vmatpush1.xpose.msra.mxu0 %v842
          %844 = vmatprep.subr.mxu0 0.0
          %v845 = vand.u32 %v521, 4294901760
          %v846 = vsub.f32 %v521, %v845
          %847 = vmatpush1.xpose.msra.mxu0 %v846
          %848 = vmatprep.subr.mxu0 0.0
          %v849 = vand.u32 %v520, 4294901760
          %v850 = vsub.f32 %v520, %v849
          %851 = vmatpush1.xpose.msra.mxu0 %v850
          %852 = vmatprep.subr.mxu0 0.0
          %v853 = vand.u32 %v519, 4294901760
          %v854 = vsub.f32 %v519, %v853
          %855 = vmatpush1.xpose.msra.mxu0 %v854
          %856 = vmatprep.subr.mxu0 0.0
          %v857 = vand.u32 %v518, 4294901760
          %v858 = vsub.f32 %v518, %v857
          %859 = vmatpush1.xpose.msra.mxu0 %v858
          %860 = vmatprep.subr.mxu0 0.0
          %v861 = vand.u32 %v517, 4294901760
          %v862 = vsub.f32 %v517, %v861
          %863 = vmatpush1.xpose.msra.mxu0 %v862
          %864 = vmatprep.subr.mxu0 0.0
          %v865 = vand.u32 %v516, 4294901760
          %v866 = vsub.f32 %v516, %v865
          %867 = vmatpush1.xpose.msra.mxu0 %v866
          %868 = vmatprep.subr.mxu0 0.0
          %v869 = vand.u32 %v515, 4294901760
          %v870 = vsub.f32 %v515, %v869
          %871 = vmatpush1.xpose.msra.mxu0 %v870
          %872 = vmatprep.subr.mxu0 0.0
          %v873 = vand.u32 %v514, 4294901760
          %v874 = vsub.f32 %v514, %v873
          %875 = vmatpush1.xpose.msra.mxu0 %v874
          %876 = vmatprep.subr.mxu0 0.0
          %v877 = vand.u32 %v513, 4294901760
          %v878 = vsub.f32 %v513, %v877
          %879 = vmatpush1.xpose.msra.mxu0 %v878
          %880 = vmatprep.subr.mxu0 0.0
          %v881 = vand.u32 %v512, 4294901760
          %v882 = vsub.f32 %v512, %v881
          %883 = vmatpush1.xpose.msra.mxu0 %v882
          %884 = vmatprep.subr.mxu0 0.0
          %v885 = vand.u32 %v511, 4294901760
          %v886 = vsub.f32 %v511, %v885
          %887 = vmatpush1.xpose.msra.mxu0 %v886
          %888 = vmatprep.subr.mxu0 0.0
          %889 = vmatpush2.xpose.msra.mxu0 0.0
          %890 = vmatprep.subr.mxu0 0.0
          %891 = vmatpush2.xpose.msra.mxu0 0.0
          %892 = vmatprep.subr.mxu0 0.0
          %893 = vmatpush2.xpose.msra.mxu0 0.0
          %894 = vmatprep.subr.mxu0 0.0
          %895 = vmatpush2.xpose.msra.mxu0 0.0
          %896 = vmatprep.subr.mxu0 0.0
          %897 = vmatpush2.xpose.msra.mxu0 0.0
          %898 = vmatprep.subr.mxu0 0.0
          %899 = vmatpush2.xpose.msra.mxu0 0.0
          %900 = vmatprep.subr.mxu0 0.0
          %901 = vmatpush2.xpose.msra.mxu0 0.0
          %902 = vmatprep.subr.mxu0 0.0
          %903 = vmatpush2.xpose.msra.mxu0 0.0
          %904 = vmatprep.subr.mxu0 0.0
          %905 = vmatpush2.xpose.msra.mxu0 0.0
          %906 = vmatprep.subr.mxu0 0.0
          %907 = vmatpush2.xpose.msra.mxu0 0.0
          %908 = vmatprep.subr.mxu0 0.0
          %909 = vmatpush2.xpose.msra.mxu0 0.0
          %910 = vmatprep.subr.mxu0 0.0
          %911 = vmatpush2.xpose.msra.mxu0 0.0
          %912 = vmatprep.subr.mxu0 0.0
          %913 = vmatpush2.xpose.msra.mxu0 0.0
          %914 = vmatprep.subr.mxu0 0.0
          %915 = vmatpush2.xpose.msra.mxu0 0.0
          %916 = vmatprep.subr.mxu0 0.0
          %917 = vmatpush2.xpose.msra.mxu0 0.0
          %918 = vmatprep.subr.mxu0 0.0
          %919 = vmatpush2.xpose.msra.mxu0 0.0
          %920 = vmatprep.mubr.f32.mxu0 0.0
          %v921 = vand.u32 %v507, 4294901760
          %v922 = vsub.f32 %v507, %v921
          %923 = vmatmul.mubr.f32.gmra.mxu0 %v922
          %v924 = vpop.f32.mrf.mxu0
          %v925 = vadd.f32 %v803, %v924
          %v926 = vpop.f32.mrf.mxu0
          %927 = vmatprep.mubr.f32.mxu0 0.0
          %v928 = vand.u32 %v508, 4294901760
          %v929 = vsub.f32 %v508, %v928
          %930 = vmatmul.mubr.f32.gmra.mxu0 %v929
          %v931 = vpop.f32.mrf.mxu0
          %v932 = vadd.f32 %v809, %v931
          %v933 = vpop.f32.mrf.mxu0
          %934 = vmatprep.mubr.f32.mxu0 0.0
          %v935 = vand.u32 %v509, 4294901760
          %v936 = vsub.f32 %v509, %v935
          %937 = vmatmul.mubr.f32.gmra.mxu0 %v936
          %v938 = vpop.f32.mrf.mxu0
          %v939 = vadd.f32 %v815, %v938
          %v940 = vpop.f32.mrf.mxu0
          %941 = vmatprep.mubr.f32.mxu0 0.0
          %v942 = vand.u32 %v510, 4294901760
          %v943 = vsub.f32 %v510, %v942
          %944 = vmatmul.mubr.f32.gmra.mxu0 %v943
          %v945 = vpop.f32.mrf.mxu0
          %v946 = vadd.f32 %v821, %v945
          %v947 = vpop.f32.mrf.mxu0
          %948 = vdwg.mxu0
          %949 = vmatprep.subr.mxu0 0.0
          %v950 = vand.u32 %v526, 4294901760
          %951 = vmatpush1.xpose.msra.mxu0 %v950
          %952 = vmatprep.subr.mxu0 0.0
          %v953 = vand.u32 %v525, 4294901760
          %954 = vmatpush1.xpose.msra.mxu0 %v953
          %955 = vmatprep.subr.mxu0 0.0
          %v956 = vand.u32 %v524, 4294901760
          %957 = vmatpush1.xpose.msra.mxu0 %v956
          %958 = vmatprep.subr.mxu0 0.0
          %v959 = vand.u32 %v523, 4294901760
          %960 = vmatpush1.xpose.msra.mxu0 %v959
          %961 = vmatprep.subr.mxu0 0.0
          %v962 = vand.u32 %v522, 4294901760
          %963 = vmatpush1.xpose.msra.mxu0 %v962
          %964 = vmatprep.subr.mxu0 0.0
          %v965 = vand.u32 %v521, 4294901760
          %966 = vmatpush1.xpose.msra.mxu0 %v965
          %967 = vmatprep.subr.mxu0 0.0
          %v968 = vand.u32 %v520, 4294901760
          %969 = vmatpush1.xpose.msra.mxu0 %v968
          %970 = vmatprep.subr.mxu0 0.0
          %v971 = vand.u32 %v519, 4294901760
          %972 = vmatpush1.xpose.msra.mxu0 %v971
          %973 = vmatprep.subr.mxu0 0.0
          %v974 = vand.u32 %v518, 4294901760
          %975 = vmatpush1.xpose.msra.mxu0 %v974
          %976 = vmatprep.subr.mxu0 0.0
          %v977 = vand.u32 %v517, 4294901760
          %978 = vmatpush1.xpose.msra.mxu0 %v977
          %979 = vmatprep.subr.mxu0 0.0
          %v980 = vand.u32 %v516, 4294901760
          %981 = vmatpush1.xpose.msra.mxu0 %v980
          %982 = vmatprep.subr.mxu0 0.0
          %v983 = vand.u32 %v515, 4294901760
          %984 = vmatpush1.xpose.msra.mxu0 %v983
          %985 = vmatprep.subr.mxu0 0.0
          %v986 = vand.u32 %v514, 4294901760
          %987 = vmatpush1.xpose.msra.mxu0 %v986
          %988 = vmatprep.subr.mxu0 0.0
          %v989 = vand.u32 %v513, 4294901760
          %990 = vmatpush1.xpose.msra.mxu0 %v989
          %991 = vmatprep.subr.mxu0 0.0
          %v992 = vand.u32 %v512, 4294901760
          %993 = vmatpush1.xpose.msra.mxu0 %v992
          %994 = vmatprep.subr.mxu0 0.0
          %v995 = vand.u32 %v511, 4294901760
          %996 = vmatpush1.xpose.msra.mxu0 %v995
          %997 = vmatprep.subr.mxu0 0.0
          %998 = vmatpush2.xpose.msra.mxu0 0.0
          %999 = vmatprep.subr.mxu0 0.0
          %1000 = vmatpush2.xpose.msra.mxu0 0.0
          %1001 = vmatprep.subr.mxu0 0.0
          %1002 = vmatpush2.xpose.msra.mxu0 0.0
          %1003 = vmatprep.subr.mxu0 0.0
          %1004 = vmatpush2.xpose.msra.mxu0 0.0
          %1005 = vmatprep.subr.mxu0 0.0
          %1006 = vmatpush2.xpose.msra.mxu0 0.0
          %1007 = vmatprep.subr.mxu0 0.0
          %1008 = vmatpush2.xpose.msra.mxu0 0.0
          %1009 = vmatprep.subr.mxu0 0.0
          %1010 = vmatpush2.xpose.msra.mxu0 0.0
          %1011 = vmatprep.subr.mxu0 0.0
          %1012 = vmatpush2.xpose.msra.mxu0 0.0
          %1013 = vmatprep.subr.mxu0 0.0
          %1014 = vmatpush2.xpose.msra.mxu0 0.0
          %1015 = vmatprep.subr.mxu0 0.0
          %1016 = vmatpush2.xpose.msra.mxu0 0.0
          %1017 = vmatprep.subr.mxu0 0.0
          %1018 = vmatpush2.xpose.msra.mxu0 0.0
          %1019 = vmatprep.subr.mxu0 0.0
          %1020 = vmatpush2.xpose.msra.mxu0 0.0
          %1021 = vmatprep.subr.mxu0 0.0
          %1022 = vmatpush2.xpose.msra.mxu0 0.0
          %1023 = vmatprep.subr.mxu0 0.0
          %1024 = vmatpush2.xpose.msra.mxu0 0.0
          %1025 = vmatprep.subr.mxu0 0.0
          %1026 = vmatpush2.xpose.msra.mxu0 0.0
          %1027 = vmatprep.subr.mxu0 0.0
          %1028 = vmatpush2.xpose.msra.mxu0 0.0
          %1029 = vmatprep.mubr.f32.mxu0 0.0
          %v1030 = vand.u32 %v507, 4294901760
          %v1031 = vsub.f32 %v507, %v1030
          %v1032 = vand.u32 %v1031, 4294901760
          %1033 = vmatmul.mubr.f32.gmra.mxu0 %v1032
          %v1034 = vpop.f32.mrf.mxu0
          %v1035 = vadd.f32 %v925, %v1034
          %v1036 = vpop.f32.mrf.mxu0
          %1037 = vmatprep.mubr.f32.mxu0 0.0
          %v1038 = vand.u32 %v508, 4294901760
          %v1039 = vsub.f32 %v508, %v1038
          %v1040 = vand.u32 %v1039, 4294901760
          %1041 = vmatmul.mubr.f32.gmra.mxu0 %v1040
          %v1042 = vpop.f32.mrf.mxu0
          %v1043 = vadd.f32 %v932, %v1042
          %v1044 = vpop.f32.mrf.mxu0
          %1045 = vmatprep.mubr.f32.mxu0 0.0
          %v1046 = vand.u32 %v509, 4294901760
          %v1047 = vsub.f32 %v509, %v1046
          %v1048 = vand.u32 %v1047, 4294901760
          %1049 = vmatmul.mubr.f32.gmra.mxu0 %v1048
          %v1050 = vpop.f32.mrf.mxu0
          %v1051 = vadd.f32 %v939, %v1050
          %v1052 = vpop.f32.mrf.mxu0
          %1053 = vmatprep.mubr.f32.mxu0 0.0
          %v1054 = vand.u32 %v510, 4294901760
          %v1055 = vsub.f32 %v510, %v1054
          %v1056 = vand.u32 %v1055, 4294901760
          %1057 = vmatmul.mubr.f32.gmra.mxu0 %v1056
          %v1058 = vpop.f32.mrf.mxu0
          %v1059 = vadd.f32 %v946, %v1058
          %v1060 = vpop.f32.mrf.mxu0
          %1061 = vdwg.mxu0
          %1062 = vmatprep.subr.mxu0 0.0
          %v1063 = vand.u32 %v526, 4294901760
          %v1064 = vsub.f32 %v526, %v1063
          %v1065 = vand.u32 %v1064, 4294901760
          %1066 = vmatpush1.xpose.msra.mxu0 %v1065
          %1067 = vmatprep.subr.mxu0 0.0
          %v1068 = vand.u32 %v525, 4294901760
          %v1069 = vsub.f32 %v525, %v1068
          %v1070 = vand.u32 %v1069, 4294901760
          %1071 = vmatpush1.xpose.msra.mxu0 %v1070
          %1072 = vmatprep.subr.mxu0 0.0
          %v1073 = vand.u32 %v524, 4294901760
          %v1074 = vsub.f32 %v524, %v1073
          %v1075 = vand.u32 %v1074, 4294901760
          %1076 = vmatpush1.xpose.msra.mxu0 %v1075
          %1077 = vmatprep.subr.mxu0 0.0
          %v1078 = vand.u32 %v523, 4294901760
          %v1079 = vsub.f32 %v523, %v1078
          %v1080 = vand.u32 %v1079, 4294901760
          %1081 = vmatpush1.xpose.msra.mxu0 %v1080
          %1082 = vmatprep.subr.mxu0 0.0
          %v1083 = vand.u32 %v522, 4294901760
          %v1084 = vsub.f32 %v522, %v1083
          %v1085 = vand.u32 %v1084, 4294901760
          %1086 = vmatpush1.xpose.msra.mxu0 %v1085
          %1087 = vmatprep.subr.mxu0 0.0
          %v1088 = vand.u32 %v521, 4294901760
          %v1089 = vsub.f32 %v521, %v1088
          %v1090 = vand.u32 %v1089, 4294901760
          %1091 = vmatpush1.xpose.msra.mxu0 %v1090
          %1092 = vmatprep.subr.mxu0 0.0
          %v1093 = vand.u32 %v520, 4294901760
          %v1094 = vsub.f32 %v520, %v1093
          %v1095 = vand.u32 %v1094, 4294901760
          %1096 = vmatpush1.xpose.msra.mxu0 %v1095
          %1097 = vmatprep.subr.mxu0 0.0
          %v1098 = vand.u32 %v519, 4294901760
          %v1099 = vsub.f32 %v519, %v1098
          %v1100 = vand.u32 %v1099, 4294901760
          %1101 = vmatpush1.xpose.msra.mxu0 %v1100
          %1102 = vmatprep.subr.mxu0 0.0
          %v1103 = vand.u32 %v518, 4294901760
          %v1104 = vsub.f32 %v518, %v1103
          %v1105 = vand.u32 %v1104, 4294901760
          %1106 = vmatpush1.xpose.msra.mxu0 %v1105
          %1107 = vmatprep.subr.mxu0 0.0
          %v1108 = vand.u32 %v517, 4294901760
          %v1109 = vsub.f32 %v517, %v1108
          %v1110 = vand.u32 %v1109, 4294901760
          %1111 = vmatpush1.xpose.msra.mxu0 %v1110
          %1112 = vmatprep.subr.mxu0 0.0
          %v1113 = vand.u32 %v516, 4294901760
          %v1114 = vsub.f32 %v516, %v1113
          %v1115 = vand.u32 %v1114, 4294901760
          %1116 = vmatpush1.xpose.msra.mxu0 %v1115
          %1117 = vmatprep.subr.mxu0 0.0
          %v1118 = vand.u32 %v515, 4294901760
          %v1119 = vsub.f32 %v515, %v1118
          %v1120 = vand.u32 %v1119, 4294901760
          %1121 = vmatpush1.xpose.msra.mxu0 %v1120
          %1122 = vmatprep.subr.mxu0 0.0
          %v1123 = vand.u32 %v514, 4294901760
          %v1124 = vsub.f32 %v514, %v1123
          %v1125 = vand.u32 %v1124, 4294901760
          %1126 = vmatpush1.xpose.msra.mxu0 %v1125
          %1127 = vmatprep.subr.mxu0 0.0
          %v1128 = vand.u32 %v513, 4294901760
          %v1129 = vsub.f32 %v513, %v1128
          %v1130 = vand.u32 %v1129, 4294901760
          %1131 = vmatpush1.xpose.msra.mxu0 %v1130
          %1132 = vmatprep.subr.mxu0 0.0
          %v1133 = vand.u32 %v512, 4294901760
          %v1134 = vsub.f32 %v512, %v1133
          %v1135 = vand.u32 %v1134, 4294901760
          %1136 = vmatpush1.xpose.msra.mxu0 %v1135
          %1137 = vmatprep.subr.mxu0 0.0
          %v1138 = vand.u32 %v511, 4294901760
          %v1139 = vsub.f32 %v511, %v1138
          %v1140 = vand.u32 %v1139, 4294901760
          %1141 = vmatpush1.xpose.msra.mxu0 %v1140
          %1142 = vmatprep.subr.mxu0 0.0
          %1143 = vmatpush2.xpose.msra.mxu0 0.0
          %1144 = vmatprep.subr.mxu0 0.0
          %1145 = vmatpush2.xpose.msra.mxu0 0.0
          %1146 = vmatprep.subr.mxu0 0.0
          %1147 = vmatpush2.xpose.msra.mxu0 0.0
          %1148 = vmatprep.subr.mxu0 0.0
          %1149 = vmatpush2.xpose.msra.mxu0 0.0
          %1150 = vmatprep.subr.mxu0 0.0
          %1151 = vmatpush2.xpose.msra.mxu0 0.0
          %1152 = vmatprep.subr.mxu0 0.0
          %1153 = vmatpush2.xpose.msra.mxu0 0.0
          %1154 = vmatprep.subr.mxu0 0.0
          %1155 = vmatpush2.xpose.msra.mxu0 0.0
          %1156 = vmatprep.subr.mxu0 0.0
          %1157 = vmatpush2.xpose.msra.mxu0 0.0
          %1158 = vmatprep.subr.mxu0 0.0
          %1159 = vmatpush2.xpose.msra.mxu0 0.0
          %1160 = vmatprep.subr.mxu0 0.0
          %1161 = vmatpush2.xpose.msra.mxu0 0.0
          %1162 = vmatprep.subr.mxu0 0.0
          %1163 = vmatpush2.xpose.msra.mxu0 0.0
          %1164 = vmatprep.subr.mxu0 0.0
          %1165 = vmatpush2.xpose.msra.mxu0 0.0
          %1166 = vmatprep.subr.mxu0 0.0
          %1167 = vmatpush2.xpose.msra.mxu0 0.0
          %1168 = vmatprep.subr.mxu0 0.0
          %1169 = vmatpush2.xpose.msra.mxu0 0.0
          %1170 = vmatprep.subr.mxu0 0.0
          %1171 = vmatpush2.xpose.msra.mxu0 0.0
          %1172 = vmatprep.subr.mxu0 0.0
          %1173 = vmatpush2.xpose.msra.mxu0 0.0
          %1174 = vmatprep.mubr.f32.mxu0 0.0
          %v1175 = vand.u32 %v507, 4294901760
          %1176 = vmatmul.mubr.f32.gmra.mxu0 %v1175
          %v1177 = vpop.f32.mrf.mxu0
          %v1178 = vadd.f32 %v1035, %v1177
          %v1179 = vpop.f32.mrf.mxu0
          %1180 = vmatprep.mubr.f32.mxu0 0.0
          %v1181 = vand.u32 %v508, 4294901760
          %1182 = vmatmul.mubr.f32.gmra.mxu0 %v1181
          %v1183 = vpop.f32.mrf.mxu0
          %v1184 = vadd.f32 %v1043, %v1183
          %v1185 = vpop.f32.mrf.mxu0
          %1186 = vmatprep.mubr.f32.mxu0 0.0
          %v1187 = vand.u32 %v509, 4294901760
          %1188 = vmatmul.mubr.f32.gmra.mxu0 %v1187
          %v1189 = vpop.f32.mrf.mxu0
          %v1190 = vadd.f32 %v1051, %v1189
          %v1191 = vpop.f32.mrf.mxu0
          %1192 = vmatprep.mubr.f32.mxu0 0.0
          %v1193 = vand.u32 %v510, 4294901760
          %1194 = vmatmul.mubr.f32.gmra.mxu0 %v1193
          %v1195 = vpop.f32.mrf.mxu0
          %v1196 = vadd.f32 %v1059, %v1195
          %v1197 = vpop.f32.mrf.mxu0
          %1198 = vdwg.mxu0
          %1199 = vmatprep.subr.mxu0 0.0
          %v1200 = vand.u32 %v526, 4294901760
          %1201 = vmatpush1.xpose.msra.mxu0 %v1200
          %1202 = vmatprep.subr.mxu0 0.0
          %v1203 = vand.u32 %v525, 4294901760
          %1204 = vmatpush1.xpose.msra.mxu0 %v1203
          %1205 = vmatprep.subr.mxu0 0.0
          %v1206 = vand.u32 %v524, 4294901760
          %1207 = vmatpush1.xpose.msra.mxu0 %v1206
          %1208 = vmatprep.subr.mxu0 0.0
          %v1209 = vand.u32 %v523, 4294901760
          %1210 = vmatpush1.xpose.msra.mxu0 %v1209
          %1211 = vmatprep.subr.mxu0 0.0
          %v1212 = vand.u32 %v522, 4294901760
          %1213 = vmatpush1.xpose.msra.mxu0 %v1212
          %1214 = vmatprep.subr.mxu0 0.0
          %v1215 = vand.u32 %v521, 4294901760
          %1216 = vmatpush1.xpose.msra.mxu0 %v1215
          %1217 = vmatprep.subr.mxu0 0.0
          %v1218 = vand.u32 %v520, 4294901760
          %1219 = vmatpush1.xpose.msra.mxu0 %v1218
          %1220 = vmatprep.subr.mxu0 0.0
          %v1221 = vand.u32 %v519, 4294901760
          %1222 = vmatpush1.xpose.msra.mxu0 %v1221
          %1223 = vmatprep.subr.mxu0 0.0
          %v1224 = vand.u32 %v518, 4294901760
          %1225 = vmatpush1.xpose.msra.mxu0 %v1224
          %1226 = vmatprep.subr.mxu0 0.0
          %v1227 = vand.u32 %v517, 4294901760
          %1228 = vmatpush1.xpose.msra.mxu0 %v1227
          %1229 = vmatprep.subr.mxu0 0.0
          %v1230 = vand.u32 %v516, 4294901760
          %1231 = vmatpush1.xpose.msra.mxu0 %v1230
          %1232 = vmatprep.subr.mxu0 0.0
          %v1233 = vand.u32 %v515, 4294901760
          %1234 = vmatpush1.xpose.msra.mxu0 %v1233
          %1235 = vmatprep.subr.mxu0 0.0
          %v1236 = vand.u32 %v514, 4294901760
          %1237 = vmatpush1.xpose.msra.mxu0 %v1236
          %1238 = vmatprep.subr.mxu0 0.0
          %v1239 = vand.u32 %v513, 4294901760
          %1240 = vmatpush1.xpose.msra.mxu0 %v1239
          %1241 = vmatprep.subr.mxu0 0.0
          %v1242 = vand.u32 %v512, 4294901760
          %1243 = vmatpush1.xpose.msra.mxu0 %v1242
          %1244 = vmatprep.subr.mxu0 0.0
          %v1245 = vand.u32 %v511, 4294901760
          %1246 = vmatpush1.xpose.msra.mxu0 %v1245
          %1247 = vmatprep.subr.mxu0 0.0
          %1248 = vmatpush2.xpose.msra.mxu0 0.0
          %1249 = vmatprep.subr.mxu0 0.0
          %1250 = vmatpush2.xpose.msra.mxu0 0.0
          %1251 = vmatprep.subr.mxu0 0.0
          %1252 = vmatpush2.xpose.msra.mxu0 0.0
          %1253 = vmatprep.subr.mxu0 0.0
          %1254 = vmatpush2.xpose.msra.mxu0 0.0
          %1255 = vmatprep.subr.mxu0 0.0
          %1256 = vmatpush2.xpose.msra.mxu0 0.0
          %1257 = vmatprep.subr.mxu0 0.0
          %1258 = vmatpush2.xpose.msra.mxu0 0.0
          %1259 = vmatprep.subr.mxu0 0.0
          %1260 = vmatpush2.xpose.msra.mxu0 0.0
          %1261 = vmatprep.subr.mxu0 0.0
          %1262 = vmatpush2.xpose.msra.mxu0 0.0
          %1263 = vmatprep.subr.mxu0 0.0
          %1264 = vmatpush2.xpose.msra.mxu0 0.0
          %1265 = vmatprep.subr.mxu0 0.0
          %1266 = vmatpush2.xpose.msra.mxu0 0.0
          %1267 = vmatprep.subr.mxu0 0.0
          %1268 = vmatpush2.xpose.msra.mxu0 0.0
          %1269 = vmatprep.subr.mxu0 0.0
          %1270 = vmatpush2.xpose.msra.mxu0 0.0
          %1271 = vmatprep.subr.mxu0 0.0
          %1272 = vmatpush2.xpose.msra.mxu0 0.0
          %1273 = vmatprep.subr.mxu0 0.0
          %1274 = vmatpush2.xpose.msra.mxu0 0.0
          %1275 = vmatprep.subr.mxu0 0.0
          %1276 = vmatpush2.xpose.msra.mxu0 0.0
          %1277 = vmatprep.subr.mxu0 0.0
          %1278 = vmatpush2.xpose.msra.mxu0 0.0
          %1279 = vmatprep.mubr.f32.mxu0 0.0
          %v1280 = vand.u32 %v507, 4294901760
          %1281 = vmatmul.mubr.f32.gmra.mxu0 %v1280
          %v1282 = vpop.f32.mrf.mxu0
          %v1283 = vadd.f32 %v1178, %v1282
          %v1284 = vpop.f32.mrf.mxu0
          %1285 = vmatprep.mubr.f32.mxu0 0.0
          %v1286 = vand.u32 %v508, 4294901760
          %1287 = vmatmul.mubr.f32.gmra.mxu0 %v1286
          %v1288 = vpop.f32.mrf.mxu0
          %v1289 = vadd.f32 %v1184, %v1288
          %v1290 = vpop.f32.mrf.mxu0
          %1291 = vmatprep.mubr.f32.mxu0 0.0
          %v1292 = vand.u32 %v509, 4294901760
          %1293 = vmatmul.mubr.f32.gmra.mxu0 %v1292
          %v1294 = vpop.f32.mrf.mxu0
          %v1295 = vadd.f32 %v1190, %v1294
          %v1296 = vpop.f32.mrf.mxu0
          %1297 = vmatprep.mubr.f32.mxu0 0.0
          %v1298 = vand.u32 %v510, 4294901760
          %1299 = vmatmul.mubr.f32.gmra.mxu0 %v1298
          %v1300 = vpop.f32.mrf.mxu0
          %v1301 = vadd.f32 %v1196, %v1300
          %v1302 = vpop.f32.mrf.mxu0
          %1303 = vdwg.mxu0
          %1305 = vset.pattern.permute.xlu0 0
          %1306 = vperm.xlu0 %1305, %v527
          %v1307 = vpop.permute.xlu0 %1306
          %1310 = vset.pattern.permute.xlu0 0
          %1311 = vperm.xlu0 %1310, %v528
          %v1312 = vpop.permute.xlu0 %1311
          %1315 = vset.pattern.permute.xlu0 0
          %1316 = vperm.xlu0 %1315, %v529
          %v1317 = vpop.permute.xlu0 %1316
          %1320 = vset.pattern.permute.xlu0 0
          %1321 = vperm.xlu0 %1320, %v530
          %v1322 = vpop.permute.xlu0 %1321
          %v1325 = vlaneseq
          %v1326 = vshrl.u32 %v1325, 7
          %v1327 = vsub.s32 0, %v1326
          %v1328 = vrot.slane %v531, %v1327
          %v1330 = vadd.f32 %v1307, %v1328
          %v1331 = vadd.f32 %v1312, %v1328
          %v1332 = vadd.f32 %v1317, %v1328
          %v1333 = vadd.f32 %v1322, %v1328
          %v1334 = vmul.f32 %v1283, 2.0
          %v1335 = vmul.f32 %v1289, 2.0
          %v1336 = vmul.f32 %v1295, 2.0
          %v1337 = vmul.f32 %v1301, 2.0
          %v1338 = vsub.f32 %v1330, %v1334
          %v1339 = vsub.f32 %v1331, %v1335
          %v1340 = vsub.f32 %v1332, %v1336
          %v1341 = vsub.f32 %v1333, %v1337
          %v1342 = vmax.f32 %v1338, 0.0
          %v1343 = vmax.f32 %v1339, 0.0
          %v1344 = vmax.f32 %v1340, 0.0
          %v1345 = vmax.f32 %v1341, 0.0
          %v1346 = vstv %s533
          %v1347 = vmul.f32 %v1342, %v1346
          %v1348 = vmul.f32 %v1343, %v1346
          %v1349 = vmul.f32 %v1344, %v1346
          %v1350 = vmul.f32 %v1345, %v1346
          %v1351 = vmul.f32 %v1347, 1.442695
          %v1352 = vpow.pop %v1351
          %v1353 = vmul.f32 %v1348, 1.442695
          %v1354 = vpow.pop %v1353
          %v1355 = vmul.f32 %v1349, 1.442695
          %v1356 = vpow.pop %v1355
          %v1357 = vmul.f32 %v1350, 1.442695
          %v1358 = vpow.pop %v1357
          %vm1359 = vnez %v532
          %v1360 = vsel %vm1359, 16843009, 0
          %v1361 = vunpack.c.0.s8 %v1360
          %v1362 = vunpack.c.1.s8 %v1360
          %v1363 = vunpack.c.2.s8 %v1360
          %v1364 = vunpack.c.3.s8 %v1360
          %v1365 = vpack.c.b16 %v1361, %v1361
          %v1366 = vpack.c.b8 %v1365, %v1365
          %v1367 = vpack.c.b16 %v1362, %v1362
          %v1368 = vpack.c.b8 %v1367, %v1367
          %v1369 = vpack.c.b16 %v1363, %v1363
          %v1370 = vpack.c.b8 %v1369, %v1369
          %v1371 = vpack.c.b16 %v1364, %v1364
          %v1372 = vpack.c.b8 %v1371, %v1371
          %vm1373 = vnez %v1366
          %vm1374 = vnez %v1368
          %vm1375 = vnez %v1370
          %vm1376 = vnez %v1372
          %v1377 = vsel %vm1373, 16843009, 0
          %v1378 = vsel %vm1374, 16843009, 0
          %v1379 = vsel %vm1375, 16843009, 0
          %v1380 = vsel %vm1376, 16843009, 0
          %v1381 = vunpack.c.0.s8 %v1377
          %v1382 = vunpack.c.0.s8 %v1378
          %v1383 = vunpack.c.0.s8 %v1379
          %v1384 = vunpack.c.0.s8 %v1380
          %vm1385 = vcmp.ne.s32.totalorder %v1381, 0
          %vm1386 = vcmp.ne.s32.totalorder %v1382, 0
          %vm1387 = vcmp.ne.s32.totalorder %v1383, 0
          %vm1388 = vcmp.ne.s32.totalorder %v1384, 0
          %v1389 = vsel %vm1385, %v1352, 0.0
          %v1390 = vsel %vm1386, %v1354, 0.0
          %v1391 = vsel %vm1387, %v1356, 0.0
          %v1392 = vsel %vm1388, %v1358, 0.0
          %v1393 = vld [vmem:[%s489] sm:$0xff]
          %v1394 = vld [vmem:[%s489 + $0x8] sm:$0xff]
          %v1395 = vld [vmem:[%s489 + $0x10] sm:$0xff]
          %v1396 = vld [vmem:[%s489 + $0x18] sm:$0xff]
          %1397 = vadd.xlane.f32.xlu0 %v1389
          %v1398 = vpop.xlane.xlu0 %1397
          %1399 = vadd.xlane.f32.xlu0 %v1390
          %v1400 = vpop.xlane.xlu0 %1399
          %1401 = vadd.xlane.f32.xlu0 %v1391
          %v1402 = vpop.xlane.xlu0 %1401
          %1403 = vadd.xlane.f32.xlu0 %v1392
          %v1404 = vpop.xlane.xlu0 %1403
          %v1405 = vadd.f32 %v1393, %v1398
          %v1406 = vadd.f32 %v1394, %v1400
          %v1407 = vadd.f32 %v1395, %v1402
          %v1408 = vadd.f32 %v1396, %v1404
          %vm1409 = vcmask 7168
          %1410 = vst.msk [vmem:[%s489] sm:$0xff] %vm1409, %v1405
          %1411 = vst.msk [vmem:[%s489 + $0x8] sm:$0xff] %vm1409, %v1406
          %1412 = vst.msk [vmem:[%s489 + $0x10] sm:$0xff] %vm1409, %v1407
          %1413 = vst.msk [vmem:[%s489 + $0x18] sm:$0xff] %vm1409, %v1408
        $region56: #{tpu_custom_call.1} parent=39 // pred_fallthru
          _
        // Predicated region
        $region57: #{tpu_custom_call.1} parent=39 // pred_check
          %p1414 = pneg %p493
        $region58: #{tpu_custom_call.1} parent=39 // pred_check_branch
          %1416 = sbr.rel (%p1414) target = $region60
        $region59: #{tpu_custom_call.1} parent=39 // pred_region
          %v1417 = vld [vmem:[%s489] sm:$0xff]
          %v1418 = vld [vmem:[%s489 + $0x8] sm:$0xff]
          %v1419 = vld [vmem:[%s489 + $0x10] sm:$0xff]
          %v1420 = vld [vmem:[%s489 + $0x18] sm:$0xff]
          %vm1421 = vcmp.gt.f32.partialorder %v1417, 0.0
          %vm1422 = vcmp.gt.f32.partialorder %v1418, 0.0
          %vm1423 = vcmp.gt.f32.partialorder %v1419, 0.0
          %vm1424 = vcmp.gt.f32.partialorder %v1420, 0.0
          %v1425 = vrsqrt.pop %v1417
          %v1426 = vrsqrt.pop %v1418
          %v1427 = vrsqrt.pop %v1419
          %v1428 = vrsqrt.pop %v1420
          %v1429 = vsel %vm1421, %v1425, 0.0
          %v1430 = vsel %vm1422, %v1426, 0.0
          %v1431 = vsel %vm1423, %v1427, 0.0
          %v1432 = vsel %vm1424, %v1428, 0.0
          %vm1433 = vcmask 7168
          %1434 = vst.msk [vmem:[%s489] sm:$0xff] %vm1433, %v1429
          %1435 = vst.msk [vmem:[%s489 + $0x8] sm:$0xff] %vm1433, %v1430
          %1436 = vst.msk [vmem:[%s489 + $0x10] sm:$0xff] %vm1433, %v1431
          %1437 = vst.msk [vmem:[%s489 + $0x18] sm:$0xff] %vm1433, %v1432
        $region60: #{tpu_custom_call.1} parent=39 // pred_fallthru
          _
        %s1438 = smul.u32 4, %s40
        %p1439 = scmp.lt.s32.totalorder %s1438, 15
        %s1440 = scalar_select %p1439, %s1438, 15
        %s1441 = smul.addr %s1440, 8
        %s1442 = scalar_lea.vmem %s8, %s1441
        // Predicated region
        $region61: #{tpu_custom_call.1} parent=39 // pred_check
          %p1443 = pneg %p246
        $region62: #{tpu_custom_call.1} parent=39 // pred_check_branch
          %1445 = sbr.rel (%p1443) target = $region64
        $region63: #{tpu_custom_call.1} parent=39 // pred_region
          %s1446 = smul.u32 4, %s40
        $region64: #{tpu_custom_call.1} parent=39 // pred_fallthru
          _
      $region40: #{tpu_custom_call.1} parent=5 // pred_fallthru
        _
      %p1447 = scmp.le.s32.totalorder 2, %s31
      // Predicated region
      $region65: #{tpu_custom_call.1} parent=5 // pred_check
        %p1448 = pneg %p1447
      $region66: #{tpu_custom_call.1} parent=5 // pred_check_branch
        %1450 = sbr.rel (%p1448) target = $region68
      $region67: #{tpu_custom_call.1} parent=5 // pred_region
        %s1451 = ssub.s32 %s31, 2
        // Predicated region
        $region69: #{tpu_custom_call.1} parent=67 // pred_check
          %p1452 = pneg %p252
        $region70: #{tpu_custom_call.1} parent=67 // pred_check_branch
          %1454 = sbr.rel (%p1452) target = $region72
        $region71: #{tpu_custom_call.1} parent=67 // pred_region
          %s1455 = smul.u32 4, %s42
          %p1456 = scmp.lt.s32.totalorder %s1455, 15
          %s1457 = scalar_select %p1456, %s1455, 15
          %s1458 = smul.addr %s1457, 8
          %s1459 = scalar_lea.vmem %s8, %s1458
        $region72: #{tpu_custom_call.1} parent=67 // pred_fallthru
          _
      $region68: #{tpu_custom_call.1} parent=5 // pred_fallthru
        _
    $region6: #{tpu_custom_call.1} parent=1 // loop_footer
      %s35 = sadd.s32 1, %s31
    $region7: #{tpu_custom_call.1} parent=1 // loop_footer_branch
      %30 = sbr.rel target = $region3
    $region8: #{tpu_custom_call.1} parent=1 // loop_exit
      _
    %1460 = vsyncpa [#allocation7], 1
    %s1461 = scalar_lea.sflag [#allocation7], 1
    %1462 = vsyncpa %s1461, 1
    %1463 = vsyncpa [#allocation9], 1
    %s1464 = scalar_lea.sflag [#allocation9], 1
    %1465 = vsyncpa %s1464, 1

</llo_original>
